<compile_context>
chip_gen: v5e
topology: v5e:2x2
jax: 0.10.0
libtpu: 0.0.40
codegen_flags: <defaults>
</compile_context>

<pallas_src>
import functools

import jax
import jax.numpy as jnp
from jax import lax
from jax.experimental import pallas as pl
from jax.experimental.pallas import tpu as pltpu


def _round_up(v, m):
    return (v + m - 1) // m * m


def _classi2_fused_kernel(x_ref, w1_ref, b1_ref, w4_ref, b4_ref, w7_ref,
                          b7_ref, o_ref, *, slope, width, kh, kw, hw, y1w):
    """One sample: conv1 -> LeakyReLU -> conv2 -> LeakyReLU -> linear.

    x_ref : (1, Cin, xw)    bf16  per-sample, channels in sublanes, flattened
                                  16-grid spatial (zero tail-pad) in lanes
    w1_ref: (kh*kw*C1, Cin) bf16  conv1 tap-concatenated weights (row = t*C1+co)
    b1_ref: (C1, 1)          f32
    w4_ref: (C2, kh*kw*C1)  bf16  conv2 tap-concatenated weights (col = t*C1+ci)
    b4_ref: (C2, 1)          f32
    w7_ref: (C2*H*W, C)     bf16  linear weights, k = c*H*W + h*W + w, zero-
                                  padded where the conv2 output does not exist
    b7_ref: (1, C)           f32
    o_ref : (1, 1, C)        f32
    """
    c1 = b1_ref.shape[0]
    c2 = b4_ref.shape[0]
    taps = tuple(i * width + j for i in range(kh) for j in range(kw))

    x = x_ref[0]                                              # (Cin, xw) bf16

    # ---- conv1: one wide bf16 matmul, then 9 shifted-slice adds on the
    #      narrow (c1, y1w) output ("full-width" layout on the 16 grid).
    z = jnp.dot(w1_ref[...], x,
                preferred_element_type=jnp.float32)           # (kh*kw*c1, xw)
    acc1 = jnp.broadcast_to(b1_ref[...], (c1, y1w)).astype(jnp.float32)
    for t, d in enumerate(taps):
        acc1 = acc1 + z[t * c1:(t + 1) * c1, d:d + y1w]
    y1 = jnp.maximum(acc1, slope * acc1)                      # LeakyReLU, f32

    # ---- conv2: lane-shifted copies of y1 concatenated along K (72) -> one
    #      matmul with full K fill instead of 9 K=8 matmuls.
    y1_cat = jnp.concatenate([y1[:, d:d + hw] for d in taps], axis=0)
    acc2 = jnp.dot(w4_ref[...], y1_cat.astype(w4_ref.dtype),
                   preferred_element_type=jnp.float32)        # (c2, hw)
    acc2 = acc2 + b4_ref[...]
    y2 = jnp.maximum(acc2, slope * acc2)                      # (c2, hw) f32

    # ---- linear: build (1, c2*hw) activation row (k = c*hw + pos, matching
    #      the pre-permuted w7) with aligned 256-lane concats, one matmul.
    ybig = jnp.concatenate([y2[c:c + 1, :] for c in range(c2)], axis=1)
    out = jnp.dot(ybig.astype(w7_ref.dtype), w7_ref[...],
                  preferred_element_type=jnp.float32)         # (1, C)
    o_ref[0] = out + b7_ref[...]


def init_torch_params(key, C=101):
    """Deterministic synthetic parameters in the native PyTorch layouts.

    Weights that feed bf16 MXU operands are snapped to the bf16 grid so the
    reference comparison isolates kernel correctness from input quantization.
    """
    ks = jax.random.split(key, 6)

    def snap(a):
        return a.astype(jnp.bfloat16).astype(jnp.float32)

    return {
        "w1": snap(jax.random.normal(ks[0], (8, 220, 3, 3), jnp.float32) * 0.02),
        "b1": jax.random.normal(ks[1], (8,), jnp.float32) * 0.02,
        "w4": snap(jax.random.normal(ks[2], (8, 8, 3, 3), jnp.float32) * 0.02),
        "b4": jax.random.normal(ks[3], (8,), jnp.float32) * 0.02,
        "w7": snap(jax.random.normal(ks[4], (C, 1152), jnp.float32) * 0.02),
        "b7": jax.random.normal(ks[5], (C,), jnp.float32) * 0.02,
    }


def prepare_params(tp, H=16, W=16):
    """Convert PyTorch-layout params to the lane-dense kernel layouts."""
    c1, cin, kh, kw = tp["w1"].shape
    c2, c1_in, kh2, kw2 = tp["w4"].shape
    C = tp["w7"].shape[0]
    h2 = H - (kh - 1) - (kh2 - 1)          # spatial after the two VALID convs
    w2 = W - (kw - 1) - (kw2 - 1)
    # Full-width / garbage-row safety margins (review concern): valid conv
    # outputs must exist and the Linear in_features must match c2*h2*w2.
    assert c1_in == c1 and kh2 == kh and kw2 == kw
    assert h2 > 0 and w2 > 0, (h2, w2)
    assert tp["w7"].shape[1] == c2 * h2 * w2, (tp["w7"].shape, c2, h2, w2)

    # conv1: (Cout, Cin, kh, kw) -> (kh*kw*Cout, Cin), row = (i*kw+j)*Cout + co
    w1 = jnp.transpose(tp["w1"], (2, 3, 0, 1)).reshape(kh * kw * c1, cin)
    # conv2: (Cout, Cin, kh, kw) -> (Cout, kh*kw*Cin), col = (i*kw+j)*Cin + ci
    w4 = jnp.transpose(tp["w4"], (0, 2, 3, 1)).reshape(c2, kh * kw * c1)

    # linear: (C, c2*h2*w2) CHW flatten -> (c2*H*W, C) full-width layout with
    # zeros at positions that are not real conv2 outputs (h>=h2 or w>=w2).
    w7 = tp["w7"].reshape(C, c2, h2, w2)
    w7 = jnp.pad(w7, ((0, 0), (0, 0), (0, H - h2), (0, W - w2)))
    w7 = w7.reshape(C, c2 * H * W).T

    return {
        "w1": w1.astype(jnp.bfloat16), "b1": tp["b1"].reshape(c1, 1),
        "w4": w4.astype(jnp.bfloat16), "b4": tp["b4"].reshape(c2, 1),
        "w7": w7.astype(jnp.bfloat16), "b7": tp["b7"].reshape(1, C),
    }


def classi2_forward(x_nchw, params):
    slope = 0.1
    N, Cin, H, W = x_nchw.shape
    c1 = params["b1"].shape[0]
    c2 = params["b4"].shape[0]
    C = params["b7"].shape[1]
    kk = params["w1"].shape[0] // c1
    kh = kw = int(round(kk ** 0.5))

    hw = H * W
    d_max = (kh - 1) * W + (kw - 1)        # largest tap offset (34)
    y1w = hw + d_max                       # conv1 output width needed by conv2
    xw = _round_up(y1w + d_max, 128)       # padded per-sample lane width

    # NCHW -> (N, Cin, H*W) + zero lane tail-pad; bf16 MXU operands.
    x = x_nchw.reshape(N, Cin, hw).astype(jnp.bfloat16)
    x = jnp.pad(x, ((0, 0), (0, 0), (0, xw - hw)))

    kernel = functools.partial(
        _classi2_fused_kernel, slope=slope, width=W, kh=kh, kw=kw,
        hw=hw, y1w=y1w)

    out = pl.pallas_call(
        kernel,
        out_shape=jax.ShapeDtypeStruct((N, 1, C), jnp.float32),
        grid=(N,),
        in_specs=[
            pl.BlockSpec((1, Cin, xw), lambda n: (n, 0, 0)),      # x (per sample)
            pl.BlockSpec(params["w1"].shape, lambda n: (0, 0)),   # resident
            pl.BlockSpec(params["b1"].shape, lambda n: (0, 0)),
            pl.BlockSpec(params["w4"].shape, lambda n: (0, 0)),
            pl.BlockSpec(params["b4"].shape, lambda n: (0, 0)),
            pl.BlockSpec(params["w7"].shape, lambda n: (0, 0)),
            pl.BlockSpec(params["b7"].shape, lambda n: (0, 0)),
        ],
        out_specs=pl.BlockSpec((1, 1, C), lambda n: (n, 0, 0)),
        compiler_params=pltpu.CompilerParams(
            dimension_semantics=("parallel",)),
    )(x, params["w1"], params["b1"], params["w4"], params["b4"],
      params["w7"], params["b7"])

    return out.reshape(N, C)


def classi2_reference(x, tp):
    """Plain-JAX reference (eval-mode PyTorch semantics) for validation."""
    dn = ("NCHW", "OIHW", "NCHW")
    hi = lax.Precision.HIGHEST
    y = lax.conv_general_dilated(x, tp["w1"], (1, 1), "VALID",
                                 dimension_numbers=dn, precision=hi)
    y = y + tp["b1"].reshape(1, -1, 1, 1)
    y = jnp.where(y > 0, y, 0.1 * y)
    y = lax.conv_general_dilated(y, tp["w4"], (1, 1), "VALID",
                                 dimension_numbers=dn, precision=hi)
    y = y + tp["b4"].reshape(1, -1, 1, 1)
    y = jnp.where(y > 0, y, 0.1 * y)
    flat = y.reshape(y.shape[0], -1)                 # NCHW flatten == view(N,-1)
    return jnp.dot(flat, tp["w7"].T, precision=hi) + tp["b7"]


if __name__ == "__main__":
    key = jax.random.PRNGKey(0)
    kx, kp = jax.random.split(key)
    # Shapes implied by the module: 220 input channels, 16x16 spatial
    # (so the flattened conv stack is 8*12*12 = 1152), small batch of 2.
    x = jax.random.normal(kx, (2, 220, 16, 16), jnp.float32)
    x = x.astype(jnp.bfloat16).astype(jnp.float32)   # snap to bf16 grid
    torch_params = init_torch_params(kp, C=101)
    params = prepare_params(torch_params, H=16, W=16)

    out = jax.jit(classi2_forward)(x, params)
    out = jax.block_until_ready(out)

    assert out.shape == (2, 101), out.shape
    assert out.dtype == jnp.float32

    ref = classi2_reference(x, torch_params)
    err = float(jnp.max(jnp.abs(out - ref)))
    assert err < 1e-2, f"max abs err vs reference: {err}"

    print("KERNEL_OK")
</pallas_src>

<mosaic_0001>
module attributes {stable_mosaic.version = 11 : i64} {
  func.func @_classi2_fused_kernel(%arg0: i32, %arg1: memref<1x220x384xbf16, #tpu.memory_space<vmem>>, %arg2: memref<72x220xbf16, #tpu.memory_space<vmem>>, %arg3: memref<8x1xf32, #tpu.memory_space<vmem>>, %arg4: memref<8x72xbf16, #tpu.memory_space<vmem>>, %arg5: memref<8x1xf32, #tpu.memory_space<vmem>>, %arg6: memref<2048x101xbf16, #tpu.memory_space<vmem>>, %arg7: memref<1x101xf32, #tpu.memory_space<vmem>>, %arg8: memref<1x1x101xf32, #tpu.memory_space<vmem>>) attributes {dimension_semantics = [#tpu.dimension_semantics<parallel>], iteration_bounds = array<i64: 2>, scalar_prefetch = 0 : i64, scratch_operands = 0 : i64, tpu.core_type = #tpu.core_type<tc>, window_params = [{transform_indices = @transform_0, window_bounds = array<i64: 1, 220, 384>}, {pipeline_mode = #tpu.pipeline_mode<synchronous>, transform_indices = @transform_1, window_bounds = array<i64: 72, 220>}, {pipeline_mode = #tpu.pipeline_mode<synchronous>, transform_indices = @transform_2, window_bounds = array<i64: 8, 1>}, {pipeline_mode = #tpu.pipeline_mode<synchronous>, transform_indices = @transform_3, window_bounds = array<i64: 8, 72>}, {pipeline_mode = #tpu.pipeline_mode<synchronous>, transform_indices = @transform_4, window_bounds = array<i64: 8, 1>}, {pipeline_mode = #tpu.pipeline_mode<synchronous>, transform_indices = @transform_5, window_bounds = array<i64: 2048, 101>}, {pipeline_mode = #tpu.pipeline_mode<synchronous>, transform_indices = @transform_6, window_bounds = array<i64: 1, 101>}, {transform_indices = @transform_7, window_bounds = array<i64: 1, 1, 101>}]} {
    %c0 = arith.constant 0 : index
    %c0_0 = arith.constant 0 : index
    %c0_1 = arith.constant 0 : index
    %0 = vector.load %arg1[%c0, %c0_0, %c0_1] : memref<1x220x384xbf16, #tpu.memory_space<vmem>>, vector<1x220x384xbf16>
    %1 = vector.shape_cast %0 : vector<1x220x384xbf16> to vector<220x384xbf16>
    %c0_2 = arith.constant 0 : index
    %c0_3 = arith.constant 0 : index
    %2 = vector.load %arg2[%c0_2, %c0_3] : memref<72x220xbf16, #tpu.memory_space<vmem>>, vector<72x220xbf16>
    %cst = arith.constant dense<0.000000e+00> : vector<72x384xf32>
    %3 = tpu.matmul %2, %1, %cst {dimension_numbers = #tpu.dot_dimension_numbers<[1], [0], [0], [1], [0, 0, 1, 1], [], []>} : vector<72x220xbf16>, vector<220x384xbf16>, vector<72x384xf32> -> vector<72x384xf32>
    %c0_4 = arith.constant 0 : index
    %c0_5 = arith.constant 0 : index
    %4 = vector.load %arg3[%c0_4, %c0_5] : memref<8x1xf32, #tpu.memory_space<vmem>>, vector<8x1xf32>
    %5 = vector.shape_cast %4 : vector<8x1xf32> to vector<8x1xf32>
    %6 = vector.broadcast %5 : vector<8x1xf32> to vector<8x290xf32>
    %7 = vector.extract_strided_slice %3 {offsets = [0, 0], sizes = [8, 290], strides = [1, 1]} : vector<72x384xf32> to vector<8x290xf32>
    %8 = arith.addf %6, %7 : vector<8x290xf32>
    %9 = vector.extract_strided_slice %3 {offsets = [8, 1], sizes = [8, 290], strides = [1, 1]} : vector<72x384xf32> to vector<8x290xf32>
    %10 = arith.addf %8, %9 : vector<8x290xf32>
    %11 = vector.extract_strided_slice %3 {offsets = [16, 2], sizes = [8, 290], strides = [1, 1]} : vector<72x384xf32> to vector<8x290xf32>
    %12 = arith.addf %10, %11 : vector<8x290xf32>
    %13 = vector.extract_strided_slice %3 {offsets = [24, 16], sizes = [8, 290], strides = [1, 1]} : vector<72x384xf32> to vector<8x290xf32>
    %14 = arith.addf %12, %13 : vector<8x290xf32>
    %15 = vector.extract_strided_slice %3 {offsets = [32, 17], sizes = [8, 290], strides = [1, 1]} : vector<72x384xf32> to vector<8x290xf32>
    %16 = arith.addf %14, %15 : vector<8x290xf32>
    %17 = vector.extract_strided_slice %3 {offsets = [40, 18], sizes = [8, 290], strides = [1, 1]} : vector<72x384xf32> to vector<8x290xf32>
    %18 = arith.addf %16, %17 : vector<8x290xf32>
    %19 = vector.extract_strided_slice %3 {offsets = [48, 32], sizes = [8, 290], strides = [1, 1]} : vector<72x384xf32> to vector<8x290xf32>
    %20 = arith.addf %18, %19 : vector<8x290xf32>
    %21 = vector.extract_strided_slice %3 {offsets = [56, 33], sizes = [8, 290], strides = [1, 1]} : vector<72x384xf32> to vector<8x290xf32>
    %22 = arith.addf %20, %21 : vector<8x290xf32>
    %23 = vector.extract_strided_slice %3 {offsets = [64, 34], sizes = [8, 290], strides = [1, 1]} : vector<72x384xf32> to vector<8x290xf32>
    %24 = arith.addf %22, %23 : vector<8x290xf32>
    %cst_6 = arith.constant 1.000000e-01 : f32
    %25 = vector.broadcast %cst_6 : f32 to vector<8x290xf32>
    %26 = arith.mulf %25, %24 : vector<8x290xf32>
    %27 = arith.maximumf %24, %26 : vector<8x290xf32>
    %28 = vector.extract_strided_slice %27 {offsets = [0, 0], sizes = [8, 256], strides = [1, 1]} : vector<8x290xf32> to vector<8x256xf32>
    %29 = vector.extract_strided_slice %27 {offsets = [0, 1], sizes = [8, 256], strides = [1, 1]} : vector<8x290xf32> to vector<8x256xf32>
    %30 = vector.extract_strided_slice %27 {offsets = [0, 2], sizes = [8, 256], strides = [1, 1]} : vector<8x290xf32> to vector<8x256xf32>
    %31 = vector.extract_strided_slice %27 {offsets = [0, 16], sizes = [8, 256], strides = [1, 1]} : vector<8x290xf32> to vector<8x256xf32>
    %32 = vector.extract_strided_slice %27 {offsets = [0, 17], sizes = [8, 256], strides = [1, 1]} : vector<8x290xf32> to vector<8x256xf32>
    %33 = vector.extract_strided_slice %27 {offsets = [0, 18], sizes = [8, 256], strides = [1, 1]} : vector<8x290xf32> to vector<8x256xf32>
    %34 = vector.extract_strided_slice %27 {offsets = [0, 32], sizes = [8, 256], strides = [1, 1]} : vector<8x290xf32> to vector<8x256xf32>
    %35 = vector.extract_strided_slice %27 {offsets = [0, 33], sizes = [8, 256], strides = [1, 1]} : vector<8x290xf32> to vector<8x256xf32>
    %36 = vector.extract_strided_slice %27 {offsets = [0, 34], sizes = [8, 256], strides = [1, 1]} : vector<8x290xf32> to vector<8x256xf32>
    %37 = tpu.concatenate %28, %29, %30, %31, %32, %33, %34, %35, %36 in 0 : vector<8x256xf32>, vector<8x256xf32>, vector<8x256xf32>, vector<8x256xf32>, vector<8x256xf32>, vector<8x256xf32>, vector<8x256xf32>, vector<8x256xf32>, vector<8x256xf32> -> vector<72x256xf32>
    %c0_7 = arith.constant 0 : index
    %c0_8 = arith.constant 0 : index
    %38 = vector.load %arg4[%c0_7, %c0_8] : memref<8x72xbf16, #tpu.memory_space<vmem>>, vector<8x72xbf16>
    %39 = arith.truncf %37 : vector<72x256xf32> to vector<72x256xbf16>
    %cst_9 = arith.constant dense<0.000000e+00> : vector<8x256xf32>
    %40 = tpu.matmul %38, %39, %cst_9 {dimension_numbers = #tpu.dot_dimension_numbers<[1], [0], [0], [1], [0, 0, 1, 1], [], []>} : vector<8x72xbf16>, vector<72x256xbf16>, vector<8x256xf32> -> vector<8x256xf32>
    %c0_10 = arith.constant 0 : index
    %c0_11 = arith.constant 0 : index
    %41 = vector.load %arg5[%c0_10, %c0_11] : memref<8x1xf32, #tpu.memory_space<vmem>>, vector<8x1xf32>
    %42 = vector.broadcast %41 : vector<8x1xf32> to vector<8x256xf32>
    %43 = arith.addf %40, %42 : vector<8x256xf32>
    %cst_12 = arith.constant 1.000000e-01 : f32
    %44 = vector.broadcast %cst_12 : f32 to vector<8x256xf32>
    %45 = arith.mulf %44, %43 : vector<8x256xf32>
    %46 = arith.maximumf %43, %45 : vector<8x256xf32>
    %47 = vector.extract_strided_slice %46 {offsets = [0, 0], sizes = [1, 256], strides = [1, 1]} : vector<8x256xf32> to vector<1x256xf32>
    %48 = vector.extract_strided_slice %46 {offsets = [1, 0], sizes = [1, 256], strides = [1, 1]} : vector<8x256xf32> to vector<1x256xf32>
    %49 = vector.extract_strided_slice %46 {offsets = [2, 0], sizes = [1, 256], strides = [1, 1]} : vector<8x256xf32> to vector<1x256xf32>
    %50 = vector.extract_strided_slice %46 {offsets = [3, 0], sizes = [1, 256], strides = [1, 1]} : vector<8x256xf32> to vector<1x256xf32>
    %51 = vector.extract_strided_slice %46 {offsets = [4, 0], sizes = [1, 256], strides = [1, 1]} : vector<8x256xf32> to vector<1x256xf32>
    %52 = vector.extract_strided_slice %46 {offsets = [5, 0], sizes = [1, 256], strides = [1, 1]} : vector<8x256xf32> to vector<1x256xf32>
    %53 = vector.extract_strided_slice %46 {offsets = [6, 0], sizes = [1, 256], strides = [1, 1]} : vector<8x256xf32> to vector<1x256xf32>
    %54 = vector.extract_strided_slice %46 {offsets = [7, 0], sizes = [1, 256], strides = [1, 1]} : vector<8x256xf32> to vector<1x256xf32>
    %55 = tpu.concatenate %47, %48, %49, %50, %51, %52, %53, %54 in 1 : vector<1x256xf32>, vector<1x256xf32>, vector<1x256xf32>, vector<1x256xf32>, vector<1x256xf32>, vector<1x256xf32>, vector<1x256xf32>, vector<1x256xf32> -> vector<1x2048xf32>
    %56 = arith.truncf %55 : vector<1x2048xf32> to vector<1x2048xbf16>
    %c0_13 = arith.constant 0 : index
    %c0_14 = arith.constant 0 : index
    %57 = vector.load %arg6[%c0_13, %c0_14] : memref<2048x101xbf16, #tpu.memory_space<vmem>>, vector<2048x101xbf16>
    %cst_15 = arith.constant dense<0.000000e+00> : vector<1x101xf32>
    %58 = tpu.matmul %56, %57, %cst_15 {dimension_numbers = #tpu.dot_dimension_numbers<[1], [0], [0], [1], [0, 0, 1, 1], [], []>} : vector<1x2048xbf16>, vector<2048x101xbf16>, vector<1x101xf32> -> vector<1x101xf32>
    %c0_16 = arith.constant 0 : index
    %c0_17 = arith.constant 0 : index
    %59 = vector.load %arg7[%c0_16, %c0_17] : memref<1x101xf32, #tpu.memory_space<vmem>>, vector<1x101xf32>
    %60 = arith.addf %58, %59 : vector<1x101xf32>
    %c0_18 = arith.constant 0 : index
    %c0_19 = arith.constant 0 : index
    %c0_20 = arith.constant 0 : index
    %61 = vector.load %arg8[%c0_18, %c0_19, %c0_20] : memref<1x1x101xf32, #tpu.memory_space<vmem>>, vector<1x1x101xf32>
    %62 = vector.shape_cast %61 : vector<1x1x101xf32> to vector<1x101xf32>
    %63 = vector.shape_cast %60 : vector<1x101xf32> to vector<1x1x101xf32>
    tpu.vector_store %arg8[%c0_18, %c0_19, %c0_20], %63 {strides = array<i32>} : memref<1x1x101xf32, #tpu.memory_space<vmem>>, vector<1x1x101xf32>,
    return
  }
  func.func @transform_0(%arg0: i32) -> (i32, i32, i32) {
    %c0_i32 = arith.constant 0 : i32
    %c0_i32_0 = arith.constant 0 : i32
    %c0_i32_1 = arith.constant 0 : i32
    return %arg0, %c0_i32, %c0_i32_0 : i32, i32, i32
  }
  func.func @transform_1(%arg0: i32) -> (i32, i32) {
    %c0_i32 = arith.constant 0 : i32
    %c0_i32_0 = arith.constant 0 : i32
    %c0_i32_1 = arith.constant 0 : i32
    return %c0_i32, %c0_i32_0 : i32, i32
  }
  func.func @transform_2(%arg0: i32) -> (i32, i32) {
    %c0_i32 = arith.constant 0 : i32
    %c0_i32_0 = arith.constant 0 : i32
    %c0_i32_1 = arith.constant 0 : i32
    return %c0_i32, %c0_i32_0 : i32, i32
  }
  func.func @transform_3(%arg0: i32) -> (i32, i32) {
    %c0_i32 = arith.constant 0 : i32
    %c0_i32_0 = arith.constant 0 : i32
    %c0_i32_1 = arith.constant 0 : i32
    return %c0_i32, %c0_i32_0 : i32, i32
  }
  func.func @transform_4(%arg0: i32) -> (i32, i32) {
    %c0_i32 = arith.constant 0 : i32
    %c0_i32_0 = arith.constant 0 : i32
    %c0_i32_1 = arith.constant 0 : i32
    return %c0_i32, %c0_i32_0 : i32, i32
  }
  func.func @transform_5(%arg0: i32) -> (i32, i32) {
    %c0_i32 = arith.constant 0 : i32
    %c0_i32_0 = arith.constant 0 : i32
    %c0_i32_1 = arith.constant 0 : i32
    return %c0_i32, %c0_i32_0 : i32, i32
  }
  func.func @transform_6(%arg0: i32) -> (i32, i32) {
    %c0_i32 = arith.constant 0 : i32
    %c0_i32_0 = arith.constant 0 : i32
    %c0_i32_1 = arith.constant 0 : i32
    return %c0_i32, %c0_i32_0 : i32, i32
  }
  func.func @transform_7(%arg0: i32) -> (i32, i32, i32) {
    %c0_i32 = arith.constant 0 : i32
    %c0_i32_0 = arith.constant 0 : i32
    %c0_i32_1 = arith.constant 0 : i32
    return %arg0, %c0_i32, %c0_i32_0 : i32, i32, i32
  }
}

</mosaic_0001>

<llo_original>
// kernel: classi2_forward.1
$region0: #{classi2_forward.1}
  #allocation0 [shape = 'u32[]', space=smem, size = 0x4, offset = 0x4, fixed_abs, tag = 'smem constant byte address 0x4 - core index']
  #allocation1 [shape = 'u32[72,128]{1,0:T(1,128)}', space=vmem, size = 0x9000, scoped, tag = 'internal scratch']
  %s0 = inlined_call_operand.vmem [shape: bf16[2,220,384], index: 0, kind: input, shape index: {}]
  %s1 = inlined_call_operand.vmem [shape: bf16[72,220], index: 1, kind: input, shape index: {}]
  %s2 = inlined_call_operand.vmem [shape: f32[8,1], index: 2, kind: input, shape index: {}]
  %s3 = inlined_call_operand.vmem [shape: bf16[8,72], index: 3, kind: input, shape index: {}]
  %s4 = inlined_call_operand.vmem [shape: f32[8,1], index: 4, kind: input, shape index: {}]
  %s5 = inlined_call_operand.vmem [shape: bf16[2048,101], index: 5, kind: input, shape index: {}]
  %s6 = inlined_call_operand.vmem [shape: f32[1,101], index: 6, kind: input, shape index: {}]
  %s7 = inlined_call_operand.hbm [shape: f32[2,1,101], index: 7, kind: output, shape index: {}]
  %s8 = sld [smem:[#allocation0]]
  $region61: #{classi2_forward.1} parent=0
    _
  %s10 = ssub.s32 1, %s8
  %s11 = scalar_select 0, %s10, %s8
  $region1: #{classi2_forward.1} parent=0
    #allocation2 [shape = 'u8[1024]{0}', space=vmem, size = 0x400, scoped, tag = 'output window, operand 0']
    #allocation3 [shape = 's32[2]{0}', space=sflag, size = 0x8, scoped, tag = 'scoped memory for classi2_forward.1']
    %12 = vsyncpa [#allocation3], 0
    %s13 = scalar_lea.sflag [#allocation3], 1
    %14 = vsyncpa %s13, 0
    loop: start=0, step=1, limit=4
    $region2: #{classi2_forward.1} parent=1 // loop_pre_header
      _
    $region3: #{classi2_forward.1} parent=1 // loop_header
      %s16 = sphi 0, %s20
      %p17 = scmp.ge.s32.totalorder %s16, 4
      %s26 = sphi 0, %s28
      %s29 = sphi 0, %s26
      %s30 = sphi 0, %s29
      %s46 = sphi 0, %s30
      %s50 = sphi 0, %s50
      %s52 = sphi 0, %s50
      %s53 = sphi 0, %s52
      %s67 = sphi 0, %s53
      %s71 = sphi 0, %s71
      %s73 = sphi 0, %s71
      %s74 = sphi 0, %s73
      %s88 = sphi 0, %s74
      %s92 = sphi 0, %s92
      %s94 = sphi 0, %s92
      %s95 = sphi 0, %s94
      %s109 = sphi 0, %s95
      %s113 = sphi 0, %s113
      %s115 = sphi 0, %s113
      %s116 = sphi 0, %s115
      %s130 = sphi 0, %s116
      %s134 = sphi 0, %s134
      %s136 = sphi 0, %s134
      %s137 = sphi 0, %s136
      %s151 = sphi 0, %s137
      %s155 = sphi 0, %s155
      %s157 = sphi 0, %s155
      %s158 = sphi 0, %s157
      %s172 = sphi 0, %s158
      %s178 = sphi 0, %s180
      %s181 = sphi 0, %s178
      %s182 = sphi 0, %s181
      %s198 = sphi 0, %s182
    $region4: #{classi2_forward.1} parent=1 // loop_header_branch
      %19 = sbr.rel (%p17) target = $region8
    $region5: #{classi2_forward.1} parent=1 // loop_body
      %s21 = ssub.s32 %s16, 1
      %s22 = ssub.s32 %s16, 2
      %s23 = sadd.s32 %s16, 1
      %s24 = ssub.s32 %s16, %s23
      %p25 = scmp.eq.s32.totalorder %s24, 0
      %s27 = sadd.s32 %s26, 1
      %s28 = scalar_select %p25, %s26, %s27
      %p31 = pneg %p25
      %p32 = scmp.eq.s32.totalorder %s16, 1
      %p33 = por %p31, %p32
      %p34 = scmp.ne.s32.totalorder %s26, %s29
      %p35 = scmp.eq.s32.totalorder %s16, 0
      %p36 = por %p34, %p35
      %p37 = scmp.ne.s32.totalorder %s26, %s29
      %p38 = scmp.eq.s32.totalorder %s21, 1
      %p39 = por %p37, %p38
      %p40 = scmp.ne.s32.totalorder %s29, %s30
      %p41 = scmp.eq.s32.totalorder %s21, 0
      %p42 = por %p40, %p41
      %p43 = scmp.ne.s32.totalorder %s29, %s30
      %p44 = scmp.eq.s32.totalorder %s22, 1
      %p45 = por %p43, %p44
      %p47 = scmp.ne.s32.totalorder %s30, %s46
      %p48 = scmp.eq.s32.totalorder %s22, 0
      %p49 = por %p47, %p48
      %s51 = sadd.s32 %s50, 1
      %p54 = scmp.eq.s32.totalorder %s16, 1
      %p55 = scmp.ne.s32.totalorder %s50, %s52
      %p56 = scmp.eq.s32.totalorder %s16, 0
      %p57 = por %p55, %p56
      %p58 = scmp.ne.s32.totalorder %s50, %s52
      %p59 = scmp.eq.s32.totalorder %s21, 1
      %p60 = por %p58, %p59
      %p61 = scmp.ne.s32.totalorder %s52, %s53
      %p62 = scmp.eq.s32.totalorder %s21, 0
      %p63 = por %p61, %p62
      %p64 = scmp.ne.s32.totalorder %s52, %s53
      %p65 = scmp.eq.s32.totalorder %s22, 1
      %p66 = por %p64, %p65
      %p68 = scmp.ne.s32.totalorder %s53, %s67
      %p69 = scmp.eq.s32.totalorder %s22, 0
      %p70 = por %p68, %p69
      %s72 = sadd.s32 %s71, 1
      %p75 = scmp.eq.s32.totalorder %s16, 1
      %p76 = scmp.ne.s32.totalorder %s71, %s73
      %p77 = scmp.eq.s32.totalorder %s16, 0
      %p78 = por %p76, %p77
      %p79 = scmp.ne.s32.totalorder %s71, %s73
      %p80 = scmp.eq.s32.totalorder %s21, 1
      %p81 = por %p79, %p80
      %p82 = scmp.ne.s32.totalorder %s73, %s74
      %p83 = scmp.eq.s32.totalorder %s21, 0
      %p84 = por %p82, %p83
      %p85 = scmp.ne.s32.totalorder %s73, %s74
      %p86 = scmp.eq.s32.totalorder %s22, 1
      %p87 = por %p85, %p86
      %p89 = scmp.ne.s32.totalorder %s74, %s88
      %p90 = scmp.eq.s32.totalorder %s22, 0
      %p91 = por %p89, %p90
      %s93 = sadd.s32 %s92, 1
      %p96 = scmp.eq.s32.totalorder %s16, 1
      %p97 = scmp.ne.s32.totalorder %s92, %s94
      %p98 = scmp.eq.s32.totalorder %s16, 0
      %p99 = por %p97, %p98
      %p100 = scmp.ne.s32.totalorder %s92, %s94
      %p101 = scmp.eq.s32.totalorder %s21, 1
      %p102 = por %p100, %p101
      %p103 = scmp.ne.s32.totalorder %s94, %s95
      %p104 = scmp.eq.s32.totalorder %s21, 0
      %p105 = por %p103, %p104
      %p106 = scmp.ne.s32.totalorder %s94, %s95
      %p107 = scmp.eq.s32.totalorder %s22, 1
      %p108 = por %p106, %p107
      %p110 = scmp.ne.s32.totalorder %s95, %s109
      %p111 = scmp.eq.s32.totalorder %s22, 0
      %p112 = por %p110, %p111
      %s114 = sadd.s32 %s113, 1
      %p117 = scmp.eq.s32.totalorder %s16, 1
      %p118 = scmp.ne.s32.totalorder %s113, %s115
      %p119 = scmp.eq.s32.totalorder %s16, 0
      %p120 = por %p118, %p119
      %p121 = scmp.ne.s32.totalorder %s113, %s115
      %p122 = scmp.eq.s32.totalorder %s21, 1
      %p123 = por %p121, %p122
      %p124 = scmp.ne.s32.totalorder %s115, %s116
      %p125 = scmp.eq.s32.totalorder %s21, 0
      %p126 = por %p124, %p125
      %p127 = scmp.ne.s32.totalorder %s115, %s116
      %p128 = scmp.eq.s32.totalorder %s22, 1
      %p129 = por %p127, %p128
      %p131 = scmp.ne.s32.totalorder %s116, %s130
      %p132 = scmp.eq.s32.totalorder %s22, 0
      %p133 = por %p131, %p132
      %s135 = sadd.s32 %s134, 1
      %p138 = scmp.eq.s32.totalorder %s16, 1
      %p139 = scmp.ne.s32.totalorder %s134, %s136
      %p140 = scmp.eq.s32.totalorder %s16, 0
      %p141 = por %p139, %p140
      %p142 = scmp.ne.s32.totalorder %s134, %s136
      %p143 = scmp.eq.s32.totalorder %s21, 1
      %p144 = por %p142, %p143
      %p145 = scmp.ne.s32.totalorder %s136, %s137
      %p146 = scmp.eq.s32.totalorder %s21, 0
      %p147 = por %p145, %p146
      %p148 = scmp.ne.s32.totalorder %s136, %s137
      %p149 = scmp.eq.s32.totalorder %s22, 1
      %p150 = por %p148, %p149
      %p152 = scmp.ne.s32.totalorder %s137, %s151
      %p153 = scmp.eq.s32.totalorder %s22, 0
      %p154 = por %p152, %p153
      %s156 = sadd.s32 %s155, 1
      %p159 = scmp.eq.s32.totalorder %s16, 1
      %p160 = scmp.ne.s32.totalorder %s155, %s157
      %p161 = scmp.eq.s32.totalorder %s16, 0
      %p162 = por %p160, %p161
      %p163 = scmp.ne.s32.totalorder %s155, %s157
      %p164 = scmp.eq.s32.totalorder %s21, 1
      %p165 = por %p163, %p164
      %p166 = scmp.ne.s32.totalorder %s157, %s158
      %p167 = scmp.eq.s32.totalorder %s21, 0
      %p168 = por %p166, %p167
      %p169 = scmp.ne.s32.totalorder %s157, %s158
      %p170 = scmp.eq.s32.totalorder %s22, 1
      %p171 = por %p169, %p170
      %p173 = scmp.ne.s32.totalorder %s158, %s172
      %p174 = scmp.eq.s32.totalorder %s22, 0
      %p175 = por %p173, %p174
      %s176 = ssub.s32 %s16, %s23
      %p177 = scmp.eq.s32.totalorder %s176, 0
      %s179 = sadd.s32 %s178, 1
      %s180 = scalar_select %p177, %s178, %s179
      %p183 = pneg %p177
      %p184 = scmp.eq.s32.totalorder %s16, 1
      %p185 = por %p183, %p184
      %p186 = scmp.ne.s32.totalorder %s178, %s181
      %p187 = scmp.eq.s32.totalorder %s16, 0
      %p188 = por %p186, %p187
      %p189 = scmp.ne.s32.totalorder %s178, %s181
      %p190 = scmp.eq.s32.totalorder %s21, 1
      %p191 = por %p189, %p190
      %p192 = scmp.ne.s32.totalorder %s181, %s182
      %p193 = scmp.eq.s32.totalorder %s21, 0
      %p194 = por %p192, %p193
      %p195 = scmp.ne.s32.totalorder %s181, %s182
      %p196 = scmp.eq.s32.totalorder %s22, 1
      %p197 = por %p195, %p196
      %p199 = scmp.ne.s32.totalorder %s182, %s198
      %p200 = scmp.eq.s32.totalorder %s22, 0
      %p201 = por %p199, %p200
      %p202 = scmp.le.s32.totalorder 1, %s16
      %p203 = scmp.lt.s32.totalorder %s16, 3
      %p204 = pnand %p202, %p203
      %p205 = pneg %p204
      // Predicated region
      $region9: #{classi2_forward.1} parent=5 // pred_check
        _
      $region10: #{classi2_forward.1} parent=5 // pred_check_branch
        %207 = sbr.rel (%p204) target = $region12
      $region11: #{classi2_forward.1} parent=5 // pred_region
        %s208 = ssub.s32 %s16, 1
        // Predicated region
        $region13: #{classi2_forward.1} parent=11 // pred_check
          %p209 = pneg %p63
        $region14: #{classi2_forward.1} parent=11 // pred_check_branch
          %211 = sbr.rel (%p209) target = $region16
        $region15: #{classi2_forward.1} parent=11 // pred_region
          _
        $region16: #{classi2_forward.1} parent=11 // pred_fallthru
          _
        // Predicated region
        $region17: #{classi2_forward.1} parent=11 // pred_check
          %p212 = pneg %p84
        $region18: #{classi2_forward.1} parent=11 // pred_check_branch
          %214 = sbr.rel (%p212) target = $region20
        $region19: #{classi2_forward.1} parent=11 // pred_region
          _
        $region20: #{classi2_forward.1} parent=11 // pred_fallthru
          _
        // Predicated region
        $region21: #{classi2_forward.1} parent=11 // pred_check
          %p215 = pneg %p105
        $region22: #{classi2_forward.1} parent=11 // pred_check_branch
          %217 = sbr.rel (%p215) target = $region24
        $region23: #{classi2_forward.1} parent=11 // pred_region
          _
        $region24: #{classi2_forward.1} parent=11 // pred_fallthru
          _
        // Predicated region
        $region25: #{classi2_forward.1} parent=11 // pred_check
          %p218 = pneg %p126
        $region26: #{classi2_forward.1} parent=11 // pred_check_branch
          %220 = sbr.rel (%p218) target = $region28
        $region27: #{classi2_forward.1} parent=11 // pred_region
          _
        $region28: #{classi2_forward.1} parent=11 // pred_fallthru
          _
        // Predicated region
        $region29: #{classi2_forward.1} parent=11 // pred_check
          %p221 = pneg %p147
        $region30: #{classi2_forward.1} parent=11 // pred_check_branch
          %223 = sbr.rel (%p221) target = $region32
        $region31: #{classi2_forward.1} parent=11 // pred_region
          _
        $region32: #{classi2_forward.1} parent=11 // pred_fallthru
          _
        // Predicated region
        $region33: #{classi2_forward.1} parent=11 // pred_check
          %p224 = pneg %p168
        $region34: #{classi2_forward.1} parent=11 // pred_check_branch
          %226 = sbr.rel (%p224) target = $region36
        $region35: #{classi2_forward.1} parent=11 // pred_region
          _
        $region36: #{classi2_forward.1} parent=11 // pred_fallthru
          _
      $region12: #{classi2_forward.1} parent=5 // pred_fallthru
        _
      %p227 = scmp.lt.s32.totalorder %s16, 2
      // Predicated region
      $region37: #{classi2_forward.1} parent=5 // pred_check
        %p228 = pneg %p227
      $region38: #{classi2_forward.1} parent=5 // pred_check_branch
        %230 = sbr.rel (%p228) target = $region40
      $region39: #{classi2_forward.1} parent=5 // pred_region
        // Predicated region
        $region41: #{classi2_forward.1} parent=39 // pred_check
          %p231 = pneg %p36
        $region42: #{classi2_forward.1} parent=39 // pred_check_branch
          %233 = sbr.rel (%p231) target = $region44
        $region43: #{classi2_forward.1} parent=39 // pred_region
          %p234 = scmp.lt.s32.totalorder %s16, 1
          %s235 = scalar_select %p234, %s16, 1
          %s236 = smul.addr %s235, 84
          %s237 = smul.addr %s236, 4
          %s238 = scalar_lea.vmem %s0, %s237
        $region44: #{classi2_forward.1} parent=39 // pred_fallthru
          _
      $region40: #{classi2_forward.1} parent=5 // pred_fallthru
        _
      %p239 = scmp.le.s32.totalorder 1, %s16
      %p240 = scmp.lt.s32.totalorder %s16, 3
      %p241 = pnand %p239, %p240
      %p242 = pneg %p241
      // Predicated region
      $region45: #{classi2_forward.1} parent=5 // pred_check
        _
      $region46: #{classi2_forward.1} parent=5 // pred_check_branch
        %244 = sbr.rel (%p241) target = $region48
      $region47: #{classi2_forward.1} parent=5 // pred_region
        %s245 = ssub.s32 %s16, 1
        %p246 = scmp.lt.s32.totalorder %s21, 1
        %s247 = scalar_select %p246, %s21, 1
        %s248 = smul.addr %s247, 84
        %s249 = smul.addr %s248, 4
        %s250 = scalar_lea.vmem %s0, %s249
        %p251 = pneg %p42
        %p252 = pneg %p39
        %p253 = pneg %p63
        %p254 = pneg %p60
        %p255 = pneg %p84
        %p256 = pneg %p81
        %p257 = pneg %p105
        %p258 = pneg %p102
        %p259 = pneg %p126
        %p260 = pneg %p123
        %p261 = pneg %p147
        %p262 = pneg %p144
        %p263 = pneg %p168
        %p264 = pneg %p165
        %p265 = pneg %p194
        %p266 = pneg %p191
        %s267 = sand.u32 %s181, 1
        %s268 = scalar_lea.sflag [#allocation3], %s267
        %s269 = sand.u32 %s181, 1
        %s270 = scalar_lea.vmem [#allocation2], %s269
        %p271 = scmp.lt.s32.totalorder %s21, 1
        %s272 = scalar_select %p271, %s21, 1
        %s273 = smul.addr %s272, 84
        %s274 = smul.addr %s273, 4
        %s275 = scalar_lea.vmem %s0, %s274
        %v277 = vld [vmem:[%s275] sm:$0xff]
        %v278 = vld [vmem:[%s275 + $0x8] sm:$0xf]
        %v279 = vld [vmem:[%s275 + $0xc] sm:$0xff]
        %v280 = vld [vmem:[%s275 + $0x14] sm:$0xf]
        %v281 = vld [vmem:[%s275 + $0x18] sm:$0xff]
        %v282 = vld [vmem:[%s275 + $0x20] sm:$0xf]
        %v283 = vld [vmem:[%s275 + $0x24] sm:$0xff]
        %v284 = vld [vmem:[%s275 + $0x2c] sm:$0xf]
        %v285 = vld [vmem:[%s275 + $0x30] sm:$0xff]
        %v286 = vld [vmem:[%s275 + $0x38] sm:$0xf]
        %v287 = vld [vmem:[%s275 + $0x3c] sm:$0xff]
        %v288 = vld [vmem:[%s275 + $0x44] sm:$0xf]
        %v289 = vld [vmem:[%s275 + $0x48] sm:$0xff]
        %v290 = vld [vmem:[%s275 + $0x50] sm:$0xf]
        %v291 = vld [vmem:[%s275 + $0x54] sm:$0xff]
        %v292 = vld [vmem:[%s275 + $0x5c] sm:$0xf]
        %v293 = vld [vmem:[%s275 + $0x60] sm:$0xff]
        %v294 = vld [vmem:[%s275 + $0x68] sm:$0xf]
        %v295 = vld [vmem:[%s275 + $0x6c] sm:$0xff]
        %v296 = vld [vmem:[%s275 + $0x74] sm:$0xf]
        %v297 = vld [vmem:[%s275 + $0x78] sm:$0xff]
        %v298 = vld [vmem:[%s275 + $0x80] sm:$0xf]
        %v299 = vld [vmem:[%s275 + $0x84] sm:$0xff]
        %v300 = vld [vmem:[%s275 + $0x8c] sm:$0xf]
        %v301 = vld [vmem:[%s275 + $0x90] sm:$0xff]
        %v302 = vld [vmem:[%s275 + $0x98] sm:$0xf]
        %v303 = vld [vmem:[%s275 + $0x9c] sm:$0xff]
        %v304 = vld [vmem:[%s275 + $0xa4] sm:$0xf]
        %v305 = vld [vmem:[%s275 + $0xa8] sm:$0xff]
        %v306 = vld [vmem:[%s275 + $0xb0] sm:$0xf]
        %v307 = vld [vmem:[%s275 + $0xb4] sm:$0xff]
        %v308 = vld [vmem:[%s275 + $0xbc] sm:$0xf]
        %v309 = vld [vmem:[%s275 + $0xc0] sm:$0xff]
        %v310 = vld [vmem:[%s275 + $0xc8] sm:$0xf]
        %v311 = vld [vmem:[%s275 + $0xcc] sm:$0xff]
        %v312 = vld [vmem:[%s275 + $0xd4] sm:$0xf]
        %v313 = vld [vmem:[%s275 + $0xd8] sm:$0xff]
        %v314 = vld [vmem:[%s275 + $0xe0] sm:$0xf]
        %v315 = vld [vmem:[%s275 + $0xe4] sm:$0xff]
        %v316 = vld [vmem:[%s275 + $0xec] sm:$0xf]
        %v317 = vld [vmem:[%s275 + $0xf0] sm:$0xff]
        %v318 = vld [vmem:[%s275 + $0xf8] sm:$0xf]
        %v319 = vld [vmem:[%s275 + $0xfc] sm:$0xff]
        %v320 = vld [vmem:[%s275 + $0x104] sm:$0xf]
        %v321 = vld [vmem:[%s275 + $0x108] sm:$0xff]
        %v322 = vld [vmem:[%s275 + $0x110] sm:$0xf]
        %v323 = vld [vmem:[%s275 + $0x114] sm:$0xff]
        %v324 = vld [vmem:[%s275 + $0x11c] sm:$0xf]
        %v325 = vld [vmem:[%s275 + $0x120] sm:$0xff]
        %v326 = vld [vmem:[%s275 + $0x128] sm:$0xf]
        %v327 = vld [vmem:[%s275 + $0x12c] sm:$0xff]
        %v328 = vld [vmem:[%s275 + $0x134] sm:$0xf]
        %v329 = vld [vmem:[%s275 + $0x138] sm:$0xff]
        %v330 = vld [vmem:[%s275 + $0x140] sm:$0xf]
        %v331 = vld [vmem:[%s275 + $0x144] sm:$0x33]
        %v332 = vld [vmem:[%s275 + $0x14c] sm:$0x3]
        %v333 = vld [vmem:[%s1] sm:$0xff]
        %v334 = vld [vmem:[%s1 + $0x8] sm:$0xff]
        %v335 = vld [vmem:[%s1 + $0x10] sm:$0xff]
        %v336 = vld [vmem:[%s1 + $0x18] sm:$0xff]
        %v337 = vld [vmem:[%s1 + $0x20] sm:$0xff]
        %v338 = vld [vmem:[%s1 + $0x28] sm:$0xff]
        %v339 = vld [vmem:[%s1 + $0x30] sm:$0xff]
        %v340 = vld [vmem:[%s1 + $0x38] sm:$0xff]
        %v341 = vld [vmem:[%s1 + $0x40] sm:$0xff]
        %v351 = vunpack.c.l.b16 %v333
        %v352 = vunpack.c.h.b16 %v333
        %v353 = vunpack.c.l.b16 %v334
        %v354 = vunpack.c.h.b16 %v334
        %v355 = vunpack.c.l.b16 %v335
        %v356 = vunpack.c.h.b16 %v335
        %v357 = vunpack.c.l.b16 %v336
        %v358 = vunpack.c.h.b16 %v336
        %v359 = vunpack.c.l.b16 %v337
        %v360 = vunpack.c.h.b16 %v337
        %v361 = vunpack.c.l.b16 %v338
        %v362 = vunpack.c.h.b16 %v338
        %v363 = vunpack.c.l.b16 %v339
        %v364 = vunpack.c.h.b16 %v339
        %v365 = vunpack.c.l.b16 %v340
        %v366 = vunpack.c.h.b16 %v340
        %v367 = vunpack.c.l.b16 %v341
        %v368 = vunpack.c.h.b16 %v341
        %v369 = vpack.c.b16 %v353, %v351
        %v370 = vpack.c.b16 %v354, %v352
        %v371 = vpack.c.b16 %v357, %v355
        %v372 = vpack.c.b16 %v358, %v356
        %v373 = vpack.c.b16 %v361, %v359
        %v374 = vpack.c.b16 %v362, %v360
        %v375 = vpack.c.b16 %v365, %v363
        %v376 = vpack.c.b16 %v366, %v364
        %v377 = vpack.c.b16 %v367, %v367
        %v378 = vpack.c.b16 %v368, %v368
        %v440 = vunpack.c.l.b16 %v277
        %v441 = vunpack.c.h.b16 %v277
        %v442 = vunpack.c.l.b16 %v278
        %v443 = vunpack.c.l.b16 %v279
        %v444 = vunpack.c.h.b16 %v279
        %v445 = vunpack.c.l.b16 %v280
        %v446 = vunpack.c.l.b16 %v281
        %v447 = vunpack.c.h.b16 %v281
        %v448 = vunpack.c.l.b16 %v282
        %v449 = vunpack.c.l.b16 %v283
        %v450 = vunpack.c.h.b16 %v283
        %v451 = vunpack.c.l.b16 %v284
        %v452 = vunpack.c.l.b16 %v285
        %v453 = vunpack.c.h.b16 %v285
        %v454 = vunpack.c.l.b16 %v286
        %v455 = vunpack.c.l.b16 %v287
        %v456 = vunpack.c.h.b16 %v287
        %v457 = vunpack.c.l.b16 %v288
        %v458 = vunpack.c.l.b16 %v289
        %v459 = vunpack.c.h.b16 %v289
        %v460 = vunpack.c.l.b16 %v290
        %v461 = vunpack.c.l.b16 %v291
        %v462 = vunpack.c.h.b16 %v291
        %v463 = vunpack.c.l.b16 %v292
        %v464 = vunpack.c.l.b16 %v293
        %v465 = vunpack.c.h.b16 %v293
        %v466 = vunpack.c.l.b16 %v294
        %v467 = vunpack.c.l.b16 %v295
        %v468 = vunpack.c.h.b16 %v295
        %v469 = vunpack.c.l.b16 %v296
        %v470 = vunpack.c.l.b16 %v297
        %v471 = vunpack.c.h.b16 %v297
        %v472 = vunpack.c.l.b16 %v298
        %v473 = vunpack.c.l.b16 %v299
        %v474 = vunpack.c.h.b16 %v299
        %v475 = vunpack.c.l.b16 %v300
        %v476 = vunpack.c.l.b16 %v301
        %v477 = vunpack.c.h.b16 %v301
        %v478 = vunpack.c.l.b16 %v302
        %v479 = vunpack.c.l.b16 %v303
        %v480 = vunpack.c.h.b16 %v303
        %v481 = vunpack.c.l.b16 %v304
        %v482 = vunpack.c.l.b16 %v305
        %v483 = vunpack.c.h.b16 %v305
        %v484 = vunpack.c.l.b16 %v306
        %v485 = vunpack.c.l.b16 %v307
        %v486 = vunpack.c.h.b16 %v307
        %v487 = vunpack.c.l.b16 %v308
        %v488 = vunpack.c.l.b16 %v309
        %v489 = vunpack.c.h.b16 %v309
        %v490 = vunpack.c.l.b16 %v310
        %v491 = vunpack.c.l.b16 %v311
        %v492 = vunpack.c.h.b16 %v311
        %v493 = vunpack.c.l.b16 %v312
        %v494 = vunpack.c.l.b16 %v313
        %v495 = vunpack.c.h.b16 %v313
        %v496 = vunpack.c.l.b16 %v314
        %v497 = vunpack.c.l.b16 %v315
        %v498 = vunpack.c.h.b16 %v315
        %v499 = vunpack.c.l.b16 %v316
        %v500 = vunpack.c.l.b16 %v317
        %v501 = vunpack.c.h.b16 %v317
        %v502 = vunpack.c.l.b16 %v318
        %v503 = vunpack.c.l.b16 %v319
        %v504 = vunpack.c.h.b16 %v319
        %v505 = vunpack.c.l.b16 %v320
        %v506 = vunpack.c.l.b16 %v321
        %v507 = vunpack.c.h.b16 %v321
        %v508 = vunpack.c.l.b16 %v322
        %v509 = vunpack.c.l.b16 %v323
        %v510 = vunpack.c.h.b16 %v323
        %v511 = vunpack.c.l.b16 %v324
        %v512 = vunpack.c.l.b16 %v325
        %v513 = vunpack.c.h.b16 %v325
        %v514 = vunpack.c.l.b16 %v326
        %v515 = vunpack.c.l.b16 %v327
        %v516 = vunpack.c.h.b16 %v327
        %v517 = vunpack.c.l.b16 %v328
        %v518 = vunpack.c.l.b16 %v329
        %v519 = vunpack.c.h.b16 %v329
        %v520 = vunpack.c.l.b16 %v330
        %v521 = vunpack.c.l.b16 %v331
        %v522 = vunpack.c.h.b16 %v331
        %v523 = vunpack.c.l.b16 %v332
        %v524 = vpack.c.b16 %v443, %v440
        %v525 = vpack.c.b16 %v444, %v441
        %v526 = vpack.c.b16 %v445, %v442
        %v527 = vpack.c.b16 %v449, %v446
        %v528 = vpack.c.b16 %v450, %v447
        %v529 = vpack.c.b16 %v451, %v448
        %v530 = vpack.c.b16 %v455, %v452
        %v531 = vpack.c.b16 %v456, %v453
        %v532 = vpack.c.b16 %v457, %v454
        %v533 = vpack.c.b16 %v461, %v458
        %v534 = vpack.c.b16 %v462, %v459
        %v535 = vpack.c.b16 %v463, %v460
        %v536 = vpack.c.b16 %v467, %v464
        %v537 = vpack.c.b16 %v468, %v465
        %v538 = vpack.c.b16 %v469, %v466
        %v539 = vpack.c.b16 %v473, %v470
        %v540 = vpack.c.b16 %v474, %v471
        %v541 = vpack.c.b16 %v475, %v472
        %v542 = vpack.c.b16 %v479, %v476
        %v543 = vpack.c.b16 %v480, %v477
        %v544 = vpack.c.b16 %v481, %v478
        %v545 = vpack.c.b16 %v485, %v482
        %v546 = vpack.c.b16 %v486, %v483
        %v547 = vpack.c.b16 %v487, %v484
        %v548 = vpack.c.b16 %v491, %v488
        %v549 = vpack.c.b16 %v492, %v489
        %v550 = vpack.c.b16 %v493, %v490
        %v551 = vpack.c.b16 %v497, %v494
        %v552 = vpack.c.b16 %v498, %v495
        %v553 = vpack.c.b16 %v499, %v496
        %v554 = vpack.c.b16 %v503, %v500
        %v555 = vpack.c.b16 %v504, %v501
        %v556 = vpack.c.b16 %v505, %v502
        %v557 = vpack.c.b16 %v509, %v506
        %v558 = vpack.c.b16 %v510, %v507
        %v559 = vpack.c.b16 %v511, %v508
        %v560 = vpack.c.b16 %v515, %v512
        %v561 = vpack.c.b16 %v516, %v513
        %v562 = vpack.c.b16 %v517, %v514
        %v563 = vpack.c.b16 %v521, %v518
        %v564 = vpack.c.b16 %v522, %v519
        %v565 = vpack.c.b16 %v523, %v520
        %vm605 = vcmask 752640
        %v607 = vsel %vm605, %v370, 0
        %v610 = vsel %vm605, %v372, 0
        %v613 = vsel %vm605, %v374, 0
        %v616 = vsel %vm605, %v376, 0
        %v619 = vsel %vm605, %v378, 0
        %vm621 = vcmask 1045504
        %v623 = vsel %vm621, %v563, 0
        %v626 = vsel %vm621, %v564, 0
        %v629 = vsel %vm621, %v565, 0
        %631 = vmatpush.bf16.msra.mxu0 %v545
        %632 = vmatpush.bf16.msra.mxu0 %v542
        %633 = vmatpush.bf16.msra.mxu0 %v539
        %634 = vmatpush.bf16.msra.mxu0 %v536
        %635 = vmatpush.bf16.msra.mxu0 %v533
        %636 = vmatpush.bf16.msra.mxu0 %v530
        %637 = vmatpush.bf16.msra.mxu0 %v527
        %638 = vmatpush.bf16.msra.mxu0 %v524
        %639 = vmatmul.bf16.gmra.mxu0 %v369
        %v640 = vpop.f32.mrf.mxu0
        %v641 = vadd.f32 0.0, %v640
        %v642 = vpop.f32.mrf.mxu0
        %v643 = vadd.f32 0.0, %v642
        %644 = vmatmul.bf16.gmra.mxu0 %v371
        %v645 = vpop.f32.mrf.mxu0
        %v646 = vadd.f32 0.0, %v645
        %v647 = vpop.f32.mrf.mxu0
        %v648 = vadd.f32 0.0, %v647
        %649 = vmatmul.bf16.gmra.mxu0 %v373
        %v650 = vpop.f32.mrf.mxu0
        %v651 = vadd.f32 0.0, %v650
        %v652 = vpop.f32.mrf.mxu0
        %v653 = vadd.f32 0.0, %v652
        %654 = vmatmul.bf16.gmra.mxu0 %v375
        %v655 = vpop.f32.mrf.mxu0
        %v656 = vadd.f32 0.0, %v655
        %v657 = vpop.f32.mrf.mxu0
        %v658 = vadd.f32 0.0, %v657
        %659 = vmatmul.bf16.gmra.mxu0 %v377
        %v660 = vpop.f32.mrf.mxu0
        %v661 = vadd.f32 0.0, %v660
        %v662 = vpop.f32.mrf.mxu0
        %663 = vdwg.mxu0
        %664 = vmatpush.bf16.msra.mxu0 0
        %665 = vmatpush.bf16.msra.mxu0 0
        %666 = vmatpush.bf16.msra.mxu0 %v623
        %667 = vmatpush.bf16.msra.mxu0 %v560
        %668 = vmatpush.bf16.msra.mxu0 %v557
        %669 = vmatpush.bf16.msra.mxu0 %v554
        %670 = vmatpush.bf16.msra.mxu0 %v551
        %671 = vmatpush.bf16.msra.mxu0 %v548
        %672 = vmatmul.bf16.gmra.mxu0 %v607
        %v673 = vpop.f32.mrf.mxu0
        %v674 = vadd.f32 %v641, %v673
        %v675 = vpop.f32.mrf.mxu0
        %v676 = vadd.f32 %v643, %v675
        %677 = vmatmul.bf16.gmra.mxu0 %v610
        %v678 = vpop.f32.mrf.mxu0
        %v679 = vadd.f32 %v646, %v678
        %v680 = vpop.f32.mrf.mxu0
        %v681 = vadd.f32 %v648, %v680
        %682 = vmatmul.bf16.gmra.mxu0 %v613
        %v683 = vpop.f32.mrf.mxu0
        %v684 = vadd.f32 %v651, %v683
        %v685 = vpop.f32.mrf.mxu0
        %v686 = vadd.f32 %v653, %v685
        %687 = vmatmul.bf16.gmra.mxu0 %v616
        %v688 = vpop.f32.mrf.mxu0
        %v689 = vadd.f32 %v656, %v688
        %v690 = vpop.f32.mrf.mxu0
        %v691 = vadd.f32 %v658, %v690
        %692 = vmatmul.bf16.gmra.mxu0 %v619
        %v693 = vpop.f32.mrf.mxu0
        %v694 = vadd.f32 %v661, %v693
        %v695 = vpop.f32.mrf.mxu0
        %696 = vdwg.mxu0
        %697 = vmatpush.bf16.msra.mxu0 %v546
        %698 = vmatpush.bf16.msra.mxu0 %v543
        %699 = vmatpush.bf16.msra.mxu0 %v540
        %700 = vmatpush.bf16.msra.mxu0 %v537
        %701 = vmatpush.bf16.msra.mxu0 %v534
        %702 = vmatpush.bf16.msra.mxu0 %v531
        %703 = vmatpush.bf16.msra.mxu0 %v528
        %704 = vmatpush.bf16.msra.mxu0 %v525
        %705 = vmatmul.bf16.gmra.mxu0 %v369
        %v706 = vpop.f32.mrf.mxu0
        %v707 = vadd.f32 0.0, %v706
        %v708 = vpop.f32.mrf.mxu0
        %v709 = vadd.f32 0.0, %v708
        %710 = vmatmul.bf16.gmra.mxu0 %v371
        %v711 = vpop.f32.mrf.mxu0
        %v712 = vadd.f32 0.0, %v711
        %v713 = vpop.f32.mrf.mxu0
        %v714 = vadd.f32 0.0, %v713
        %715 = vmatmul.bf16.gmra.mxu0 %v373
        %v716 = vpop.f32.mrf.mxu0
        %v717 = vadd.f32 0.0, %v716
        %v718 = vpop.f32.mrf.mxu0
        %v719 = vadd.f32 0.0, %v718
        %720 = vmatmul.bf16.gmra.mxu0 %v375
        %v721 = vpop.f32.mrf.mxu0
        %v722 = vadd.f32 0.0, %v721
        %v723 = vpop.f32.mrf.mxu0
        %v724 = vadd.f32 0.0, %v723
        %725 = vmatmul.bf16.gmra.mxu0 %v377
        %v726 = vpop.f32.mrf.mxu0
        %v727 = vadd.f32 0.0, %v726
        %v728 = vpop.f32.mrf.mxu0
        %729 = vdwg.mxu0
        %730 = vmatpush.bf16.msra.mxu0 0
        %731 = vmatpush.bf16.msra.mxu0 0
        %732 = vmatpush.bf16.msra.mxu0 %v626
        %733 = vmatpush.bf16.msra.mxu0 %v561
        %734 = vmatpush.bf16.msra.mxu0 %v558
        %735 = vmatpush.bf16.msra.mxu0 %v555
        %736 = vmatpush.bf16.msra.mxu0 %v552
        %737 = vmatpush.bf16.msra.mxu0 %v549
        %738 = vmatmul.bf16.gmra.mxu0 %v607
        %v739 = vpop.f32.mrf.mxu0
        %v740 = vadd.f32 %v707, %v739
        %v741 = vpop.f32.mrf.mxu0
        %v742 = vadd.f32 %v709, %v741
        %743 = vmatmul.bf16.gmra.mxu0 %v610
        %v744 = vpop.f32.mrf.mxu0
        %v745 = vadd.f32 %v712, %v744
        %v746 = vpop.f32.mrf.mxu0
        %v747 = vadd.f32 %v714, %v746
        %748 = vmatmul.bf16.gmra.mxu0 %v613
        %v749 = vpop.f32.mrf.mxu0
        %v750 = vadd.f32 %v717, %v749
        %v751 = vpop.f32.mrf.mxu0
        %v752 = vadd.f32 %v719, %v751
        %753 = vmatmul.bf16.gmra.mxu0 %v616
        %v754 = vpop.f32.mrf.mxu0
        %v755 = vadd.f32 %v722, %v754
        %v756 = vpop.f32.mrf.mxu0
        %v757 = vadd.f32 %v724, %v756
        %758 = vmatmul.bf16.gmra.mxu0 %v619
        %v759 = vpop.f32.mrf.mxu0
        %v760 = vadd.f32 %v727, %v759
        %v761 = vpop.f32.mrf.mxu0
        %762 = vdwg.mxu0
        %763 = vmatpush.bf16.msra.mxu0 %v547
        %764 = vmatpush.bf16.msra.mxu0 %v544
        %765 = vmatpush.bf16.msra.mxu0 %v541
        %766 = vmatpush.bf16.msra.mxu0 %v538
        %767 = vmatpush.bf16.msra.mxu0 %v535
        %768 = vmatpush.bf16.msra.mxu0 %v532
        %769 = vmatpush.bf16.msra.mxu0 %v529
        %770 = vmatpush.bf16.msra.mxu0 %v526
        %771 = vmatmul.bf16.gmra.mxu0 %v369
        %v772 = vpop.f32.mrf.mxu0
        %v773 = vadd.f32 0.0, %v772
        %v774 = vpop.f32.mrf.mxu0
        %v775 = vadd.f32 0.0, %v774
        %776 = vmatmul.bf16.gmra.mxu0 %v371
        %v777 = vpop.f32.mrf.mxu0
        %v778 = vadd.f32 0.0, %v777
        %v779 = vpop.f32.mrf.mxu0
        %v780 = vadd.f32 0.0, %v779
        %781 = vmatmul.bf16.gmra.mxu0 %v373
        %v782 = vpop.f32.mrf.mxu0
        %v783 = vadd.f32 0.0, %v782
        %v784 = vpop.f32.mrf.mxu0
        %v785 = vadd.f32 0.0, %v784
        %786 = vmatmul.bf16.gmra.mxu0 %v375
        %v787 = vpop.f32.mrf.mxu0
        %v788 = vadd.f32 0.0, %v787
        %v789 = vpop.f32.mrf.mxu0
        %v790 = vadd.f32 0.0, %v789
        %791 = vmatmul.bf16.gmra.mxu0 %v377
        %v792 = vpop.f32.mrf.mxu0
        %v793 = vadd.f32 0.0, %v792
        %v794 = vpop.f32.mrf.mxu0
        %795 = vdwg.mxu0
        %796 = vmatpush.bf16.msra.mxu0 0
        %797 = vmatpush.bf16.msra.mxu0 0
        %798 = vmatpush.bf16.msra.mxu0 %v629
        %799 = vmatpush.bf16.msra.mxu0 %v562
        %800 = vmatpush.bf16.msra.mxu0 %v559
        %801 = vmatpush.bf16.msra.mxu0 %v556
        %802 = vmatpush.bf16.msra.mxu0 %v553
        %803 = vmatpush.bf16.msra.mxu0 %v550
        %804 = vmatmul.bf16.gmra.mxu0 %v607
        %v805 = vpop.f32.mrf.mxu0
        %v806 = vadd.f32 %v773, %v805
        %v807 = vpop.f32.mrf.mxu0
        %v808 = vadd.f32 %v775, %v807
        %809 = vmatmul.bf16.gmra.mxu0 %v610
        %v810 = vpop.f32.mrf.mxu0
        %v811 = vadd.f32 %v778, %v810
        %v812 = vpop.f32.mrf.mxu0
        %v813 = vadd.f32 %v780, %v812
        %814 = vmatmul.bf16.gmra.mxu0 %v613
        %v815 = vpop.f32.mrf.mxu0
        %v816 = vadd.f32 %v783, %v815
        %v817 = vpop.f32.mrf.mxu0
        %v818 = vadd.f32 %v785, %v817
        %819 = vmatmul.bf16.gmra.mxu0 %v616
        %v820 = vpop.f32.mrf.mxu0
        %v821 = vadd.f32 %v788, %v820
        %v822 = vpop.f32.mrf.mxu0
        %v823 = vadd.f32 %v790, %v822
        %824 = vmatmul.bf16.gmra.mxu0 %v619
        %v825 = vpop.f32.mrf.mxu0
        %v826 = vadd.f32 %v793, %v825
        %v827 = vpop.f32.mrf.mxu0
        %828 = vdwg.mxu0
        %v829 = vld [vmem:[%s2] sm:$0xff]
        %831 = vset.pattern.permute.xlu0 0
        %832 = vperm.xlu0 %831, %v829
        %v833 = vpop.permute.xlu0 %832
        %v835 = vadd.f32 %v833, %v674
        %v836 = vadd.f32 %v833, %v740
        %v837 = vadd.f32 %v833, %v806
        %841 = vrot.lane.b32.xlu0 %v676, 127
        %v842 = vpop.permute.xlu0 %841
        %843 = vrot.lane.b32.xlu0 %v742, 127
        %v844 = vpop.permute.xlu0 %843
        %845 = vrot.lane.b32.xlu0 %v808, 127
        %v846 = vpop.permute.xlu0 %845
        %vm847 = vcmask 1039360
        %v848 = vsel %vm847, %v842, %v844
        %v849 = vsel %vm847, %v844, %v846
        %v853 = vadd.f32 %v835, %v848
        %v854 = vadd.f32 %v836, %v849
        %v855 = vadd.f32 %v837, %v846
        %859 = vrot.lane.b32.xlu0 %v679, 126
        %v860 = vpop.permute.xlu0 %859
        %861 = vrot.lane.b32.xlu0 %v745, 126
        %v862 = vpop.permute.xlu0 %861
        %863 = vrot.lane.b32.xlu0 %v811, 126
        %v864 = vpop.permute.xlu0 %863
        %vm865 = vcmask 1031168
        %v866 = vsel %vm865, %v860, %v862
        %v867 = vsel %vm865, %v862, %v864
        %v871 = vadd.f32 %v853, %v866
        %v872 = vadd.f32 %v854, %v867
        %v873 = vadd.f32 %v855, %v864
        %877 = vrot.lane.b32.xlu0 %v681, 112
        %v878 = vpop.permute.xlu0 %877
        %879 = vrot.lane.b32.xlu0 %v747, 112
        %v880 = vpop.permute.xlu0 %879
        %881 = vrot.lane.b32.xlu0 %v813, 112
        %v882 = vpop.permute.xlu0 %881
        %vm883 = vcmask 916480
        %v884 = vsel %vm883, %v878, %v880
        %v885 = vsel %vm883, %v880, %v882
        %v889 = vadd.f32 %v871, %v884
        %v890 = vadd.f32 %v872, %v885
        %v891 = vadd.f32 %v873, %v882
        %895 = vrot.lane.b32.xlu0 %v684, 111
        %v896 = vpop.permute.xlu0 %895
        %897 = vrot.lane.b32.xlu0 %v750, 111
        %v898 = vpop.permute.xlu0 %897
        %899 = vrot.lane.b32.xlu0 %v816, 111
        %v900 = vpop.permute.xlu0 %899
        %vm901 = vcmask 908288
        %v902 = vsel %vm901, %v896, %v898
        %v903 = vsel %vm901, %v898, %v900
        %v907 = vadd.f32 %v889, %v902
        %v908 = vadd.f32 %v890, %v903
        %v909 = vadd.f32 %v891, %v900
        %913 = vrot.lane.b32.xlu0 %v686, 110
        %v914 = vpop.permute.xlu0 %913
        %915 = vrot.lane.b32.xlu0 %v752, 110
        %v916 = vpop.permute.xlu0 %915
        %917 = vrot.lane.b32.xlu0 %v818, 110
        %v918 = vpop.permute.xlu0 %917
        %vm919 = vcmask 900096
        %v920 = vsel %vm919, %v914, %v916
        %v921 = vsel %vm919, %v916, %v918
        %v925 = vadd.f32 %v907, %v920
        %v926 = vadd.f32 %v908, %v921
        %v927 = vadd.f32 %v909, %v918
        %931 = vrot.lane.b32.xlu0 %v689, 96
        %v932 = vpop.permute.xlu0 %931
        %933 = vrot.lane.b32.xlu0 %v755, 96
        %v934 = vpop.permute.xlu0 %933
        %935 = vrot.lane.b32.xlu0 %v821, 96
        %v936 = vpop.permute.xlu0 %935
        %vm937 = vcmask 785408
        %v938 = vsel %vm937, %v932, %v934
        %v939 = vsel %vm937, %v934, %v936
        %v943 = vadd.f32 %v925, %v938
        %v944 = vadd.f32 %v926, %v939
        %v945 = vadd.f32 %v927, %v936
        %949 = vrot.lane.b32.xlu0 %v691, 95
        %v950 = vpop.permute.xlu0 %949
        %951 = vrot.lane.b32.xlu0 %v757, 95
        %v952 = vpop.permute.xlu0 %951
        %953 = vrot.lane.b32.xlu0 %v823, 95
        %v954 = vpop.permute.xlu0 %953
        %vm955 = vcmask 777216
        %v956 = vsel %vm955, %v950, %v952
        %v957 = vsel %vm955, %v952, %v954
        %v961 = vadd.f32 %v943, %v956
        %v962 = vadd.f32 %v944, %v957
        %v963 = vadd.f32 %v945, %v954
        %967 = vrot.lane.b32.xlu0 %v694, 94
        %v968 = vpop.permute.xlu0 %967
        %969 = vrot.lane.b32.xlu0 %v760, 94
        %v970 = vpop.permute.xlu0 %969
        %971 = vrot.lane.b32.xlu0 %v826, 94
        %v972 = vpop.permute.xlu0 %971
        %vm973 = vcmask 769024
        %v974 = vsel %vm973, %v968, %v970
        %v975 = vsel %vm973, %v970, %v972
        %v979 = vadd.f32 %v961, %v974
        %v980 = vadd.f32 %v962, %v975
        %v981 = vadd.f32 %v963, %v972
        %v982 = vmul.f32 %v979, 0.1
        %v983 = vmul.f32 %v980, 0.1
        %v984 = vmul.f32 %v981, 0.1
        %v985 = vmax.f32 %v979, %v982
        %v986 = vmax.f32 %v980, %v983
        %v987 = vmax.f32 %v981, %v984
        %991 = vrot.lane.b32.xlu0 %v985, 127
        %v992 = vpop.permute.xlu0 %991
        %993 = vrot.lane.b32.xlu0 %v986, 127
        %v994 = vpop.permute.xlu0 %993
        %995 = vrot.lane.b32.xlu0 %v987, 127
        %v996 = vpop.permute.xlu0 %995
        %v997 = vsel %vm847, %v992, %v994
        %v998 = vsel %vm847, %v994, %v996
        %1001 = vrot.lane.b32.xlu0 %v985, 126
        %v1002 = vpop.permute.xlu0 %1001
        %1003 = vrot.lane.b32.xlu0 %v986, 126
        %v1004 = vpop.permute.xlu0 %1003
        %1005 = vrot.lane.b32.xlu0 %v987, 126
        %v1006 = vpop.permute.xlu0 %1005
        %v1007 = vsel %vm865, %v1002, %v1004
        %v1008 = vsel %vm865, %v1004, %v1006
        %1011 = vrot.lane.b32.xlu0 %v985, 112
        %v1012 = vpop.permute.xlu0 %1011
        %1013 = vrot.lane.b32.xlu0 %v986, 112
        %v1014 = vpop.permute.xlu0 %1013
        %1015 = vrot.lane.b32.xlu0 %v987, 112
        %v1016 = vpop.permute.xlu0 %1015
        %v1017 = vsel %vm883, %v1012, %v1014
        %v1018 = vsel %vm883, %v1014, %v1016
        %1021 = vrot.lane.b32.xlu0 %v985, 111
        %v1022 = vpop.permute.xlu0 %1021
        %1023 = vrot.lane.b32.xlu0 %v986, 111
        %v1024 = vpop.permute.xlu0 %1023
        %1025 = vrot.lane.b32.xlu0 %v987, 111
        %v1026 = vpop.permute.xlu0 %1025
        %v1027 = vsel %vm901, %v1022, %v1024
        %v1028 = vsel %vm901, %v1024, %v1026
        %1031 = vrot.lane.b32.xlu0 %v985, 110
        %v1032 = vpop.permute.xlu0 %1031
        %1033 = vrot.lane.b32.xlu0 %v986, 110
        %v1034 = vpop.permute.xlu0 %1033
        %1035 = vrot.lane.b32.xlu0 %v987, 110
        %v1036 = vpop.permute.xlu0 %1035
        %v1037 = vsel %vm919, %v1032, %v1034
        %v1038 = vsel %vm919, %v1034, %v1036
        %1041 = vrot.lane.b32.xlu0 %v985, 96
        %v1042 = vpop.permute.xlu0 %1041
        %1043 = vrot.lane.b32.xlu0 %v986, 96
        %v1044 = vpop.permute.xlu0 %1043
        %1045 = vrot.lane.b32.xlu0 %v987, 96
        %v1046 = vpop.permute.xlu0 %1045
        %v1047 = vsel %vm937, %v1042, %v1044
        %v1048 = vsel %vm937, %v1044, %v1046
        %1051 = vrot.lane.b32.xlu0 %v985, 95
        %v1052 = vpop.permute.xlu0 %1051
        %1053 = vrot.lane.b32.xlu0 %v986, 95
        %v1054 = vpop.permute.xlu0 %1053
        %1055 = vrot.lane.b32.xlu0 %v987, 95
        %v1056 = vpop.permute.xlu0 %1055
        %v1057 = vsel %vm955, %v1052, %v1054
        %v1058 = vsel %vm955, %v1054, %v1056
        %1061 = vrot.lane.b32.xlu0 %v985, 94
        %v1062 = vpop.permute.xlu0 %1061
        %1063 = vrot.lane.b32.xlu0 %v986, 94
        %v1064 = vpop.permute.xlu0 %1063
        %1065 = vrot.lane.b32.xlu0 %v987, 94
        %v1066 = vpop.permute.xlu0 %1065
        %v1067 = vsel %vm973, %v1062, %v1064
        %v1068 = vsel %vm973, %v1064, %v1066
        %v1071 = vld [vmem:[%s3] sm:$0xf]
        %v1072 = vpack.c.bf16 %v997, %v985
        %v1073 = vpack.c.bf16 %v998, %v986
        %v1074 = vpack.c.bf16 %v1017, %v1007
        %v1075 = vpack.c.bf16 %v1018, %v1008
        %v1076 = vpack.c.bf16 %v1037, %v1027
        %v1077 = vpack.c.bf16 %v1038, %v1028
        %v1078 = vpack.c.bf16 %v1057, %v1047
        %v1079 = vpack.c.bf16 %v1058, %v1048
        %v1080 = vpack.c.bf16 %v1067, %v1067
        %v1081 = vpack.c.bf16 %v1068, %v1068
        %v1082 = vld [vmem:[%s4] sm:$0xff]
        %1084 = vset.pattern.permute.xlu0 0
        %1085 = vperm.xlu0 %1084, %v1082
        %v1086 = vpop.permute.xlu0 %1085
        %vm1088 = vcmask 588800
        %v1090 = vsel %vm1088, %v1071, 0
        %vm1092 = vcmask 1043456
        %v1094 = vsel %vm1092, %v1080, 0
        %v1097 = vsel %vm1092, %v1081, 0
        %1099 = vmatpush.bf16.msra.mxu0 0
        %1100 = vmatpush.bf16.msra.mxu0 0
        %1101 = vmatpush.bf16.msra.mxu0 0
        %1102 = vmatpush.bf16.msra.mxu0 %v1094
        %1103 = vmatpush.bf16.msra.mxu0 %v1078
        %1104 = vmatpush.bf16.msra.mxu0 %v1076
        %1105 = vmatpush.bf16.msra.mxu0 %v1074
        %1106 = vmatpush.bf16.msra.mxu0 %v1072
        %1107 = vmatmul.bf16.gmra.mxu0 %v1090
        %v1108 = vpop.f32.mrf.mxu0
        %v1109 = vadd.f32 %v1086, %v1108
        %v1110 = vpop.f32.mrf.mxu0
        %1111 = vdwg.mxu0
        %1112 = vmatpush.bf16.msra.mxu0 0
        %1113 = vmatpush.bf16.msra.mxu0 0
        %1114 = vmatpush.bf16.msra.mxu0 0
        %1115 = vmatpush.bf16.msra.mxu0 %v1097
        %1116 = vmatpush.bf16.msra.mxu0 %v1079
        %1117 = vmatpush.bf16.msra.mxu0 %v1077
        %1118 = vmatpush.bf16.msra.mxu0 %v1075
        %1119 = vmatpush.bf16.msra.mxu0 %v1073
        %1120 = vmatmul.bf16.gmra.mxu0 %v1090
        %v1121 = vpop.f32.mrf.mxu0
        %v1122 = vadd.f32 %v1086, %v1121
        %v1123 = vpop.f32.mrf.mxu0
        %1124 = vdwg.mxu0
        %v1125 = vmul.f32 %v1109, 0.1
        %v1126 = vmul.f32 %v1122, 0.1
        %v1127 = vmax.f32 %v1109, %v1125
        %v1128 = vmax.f32 %v1122, %v1126
        %v1131 = vrot.slane %v1127, 1
        %v1132 = vrot.slane %v1128, 1
        %v1135 = vrot.slane %v1127, 2
        %v1136 = vrot.slane %v1128, 2
        %v1139 = vrot.slane %v1127, 3
        %v1140 = vrot.slane %v1128, 3
        %v1143 = vrot.slane %v1127, 4
        %v1144 = vrot.slane %v1128, 4
        %v1147 = vrot.slane %v1127, 5
        %v1148 = vrot.slane %v1128, 5
        %v1151 = vrot.slane %v1127, 6
        %v1152 = vrot.slane %v1128, 6
        %v1155 = vrot.slane %v1127, 7
        %v1156 = vrot.slane %v1128, 7
        %v1159 = vpack.c.bf16 %v1127, %v1127
        %v1160 = vpack.c.bf16 %v1128, %v1128
        %v1161 = vpack.c.bf16 %v1131, %v1131
        %v1162 = vpack.c.bf16 %v1132, %v1132
        %v1163 = vpack.c.bf16 %v1135, %v1135
        %v1164 = vpack.c.bf16 %v1136, %v1136
        %v1165 = vpack.c.bf16 %v1139, %v1139
        %v1166 = vpack.c.bf16 %v1140, %v1140
        %v1167 = vpack.c.bf16 %v1143, %v1143
        %v1168 = vpack.c.bf16 %v1144, %v1144
        %v1169 = vpack.c.bf16 %v1147, %v1147
        %v1170 = vpack.c.bf16 %v1148, %v1148
        %v1171 = vpack.c.bf16 %v1151, %v1151
        %v1172 = vpack.c.bf16 %v1152, %v1152
        %v1173 = vpack.c.bf16 %v1155, %v1155
        %v1174 = vpack.c.bf16 %v1156, %v1156
        %v1175 = vld [vmem:[%s5] sm:$0xf]
        %v1176 = vld [vmem:[%s5 + $0x4] sm:$0xf]
        %v1177 = vld [vmem:[%s5 + $0x8] sm:$0xf]
        %v1178 = vld [vmem:[%s5 + $0xc] sm:$0xf]
        %v1179 = vld [vmem:[%s5 + $0x10] sm:$0xf]
        %v1180 = vld [vmem:[%s5 + $0x14] sm:$0xf]
        %v1181 = vld [vmem:[%s5 + $0x18] sm:$0xf]
        %v1182 = vld [vmem:[%s5 + $0x1c] sm:$0xf]
        %v1183 = vld [vmem:[%s5 + $0x20] sm:$0xf]
        %v1184 = vld [vmem:[%s5 + $0x24] sm:$0xf]
        %v1185 = vld [vmem:[%s5 + $0x28] sm:$0xf]
        %v1186 = vld [vmem:[%s5 + $0x2c] sm:$0xf]
        %v1187 = vld [vmem:[%s5 + $0x30] sm:$0xf]
        %v1188 = vld [vmem:[%s5 + $0x34] sm:$0xf]
        %v1189 = vld [vmem:[%s5 + $0x38] sm:$0xf]
        %v1190 = vld [vmem:[%s5 + $0x3c] sm:$0xf]
        %v1191 = vld [vmem:[%s5 + $0x40] sm:$0xf]
        %v1192 = vld [vmem:[%s5 + $0x44] sm:$0xf]
        %v1193 = vld [vmem:[%s5 + $0x48] sm:$0xf]
        %v1194 = vld [vmem:[%s5 + $0x4c] sm:$0xf]
        %v1195 = vld [vmem:[%s5 + $0x50] sm:$0xf]
        %v1196 = vld [vmem:[%s5 + $0x54] sm:$0xf]
        %v1197 = vld [vmem:[%s5 + $0x58] sm:$0xf]
        %v1198 = vld [vmem:[%s5 + $0x5c] sm:$0xf]
        %v1199 = vld [vmem:[%s5 + $0x60] sm:$0xf]
        %v1200 = vld [vmem:[%s5 + $0x64] sm:$0xf]
        %v1201 = vld [vmem:[%s5 + $0x68] sm:$0xf]
        %v1202 = vld [vmem:[%s5 + $0x6c] sm:$0xf]
        %v1203 = vld [vmem:[%s5 + $0x70] sm:$0xf]
        %v1204 = vld [vmem:[%s5 + $0x74] sm:$0xf]
        %v1205 = vld [vmem:[%s5 + $0x78] sm:$0xf]
        %v1206 = vld [vmem:[%s5 + $0x7c] sm:$0xf]
        %v1207 = vld [vmem:[%s5 + $0x80] sm:$0xf]
        %v1208 = vld [vmem:[%s5 + $0x84] sm:$0xf]
        %v1209 = vld [vmem:[%s5 + $0x88] sm:$0xf]
        %v1210 = vld [vmem:[%s5 + $0x8c] sm:$0xf]
        %v1211 = vld [vmem:[%s5 + $0x90] sm:$0xf]
        %v1212 = vld [vmem:[%s5 + $0x94] sm:$0xf]
        %v1213 = vld [vmem:[%s5 + $0x98] sm:$0xf]
        %v1214 = vld [vmem:[%s5 + $0x9c] sm:$0xf]
        %v1215 = vld [vmem:[%s5 + $0xa0] sm:$0xf]
        %v1216 = vld [vmem:[%s5 + $0xa4] sm:$0xf]
        %v1217 = vld [vmem:[%s5 + $0xa8] sm:$0xf]
        %v1218 = vld [vmem:[%s5 + $0xac] sm:$0xf]
        %v1219 = vld [vmem:[%s5 + $0xb0] sm:$0xf]
        %v1220 = vld [vmem:[%s5 + $0xb4] sm:$0xf]
        %v1221 = vld [vmem:[%s5 + $0xb8] sm:$0xf]
        %v1222 = vld [vmem:[%s5 + $0xbc] sm:$0xf]
        %v1223 = vld [vmem:[%s5 + $0xc0] sm:$0xf]
        %v1224 = vld [vmem:[%s5 + $0xc4] sm:$0xf]
        %v1225 = vld [vmem:[%s5 + $0xc8] sm:$0xf]
        %v1226 = vld [vmem:[%s5 + $0xcc] sm:$0xf]
        %v1227 = vld [vmem:[%s5 + $0xd0] sm:$0xf]
        %v1228 = vld [vmem:[%s5 + $0xd4] sm:$0xf]
        %v1229 = vld [vmem:[%s5 + $0xd8] sm:$0xf]
        %v1230 = vld [vmem:[%s5 + $0xdc] sm:$0xf]
        %v1231 = vld [vmem:[%s5 + $0xe0] sm:$0xf]
        %v1232 = vld [vmem:[%s5 + $0xe4] sm:$0xf]
        %v1233 = vld [vmem:[%s5 + $0xe8] sm:$0xf]
        %v1234 = vld [vmem:[%s5 + $0xec] sm:$0xf]
        %v1235 = vld [vmem:[%s5 + $0xf0] sm:$0xf]
        %v1236 = vld [vmem:[%s5 + $0xf4] sm:$0xf]
        %v1237 = vld [vmem:[%s5 + $0xf8] sm:$0xf]
        %v1238 = vld [vmem:[%s5 + $0xfc] sm:$0xf]
        %v1239 = vld [vmem:[%s5 + $0x100] sm:$0xf]
        %v1240 = vld [vmem:[%s5 + $0x104] sm:$0xf]
        %v1241 = vld [vmem:[%s5 + $0x108] sm:$0xf]
        %v1242 = vld [vmem:[%s5 + $0x10c] sm:$0xf]
        %v1243 = vld [vmem:[%s5 + $0x110] sm:$0xf]
        %v1244 = vld [vmem:[%s5 + $0x114] sm:$0xf]
        %v1245 = vld [vmem:[%s5 + $0x118] sm:$0xf]
        %v1246 = vld [vmem:[%s5 + $0x11c] sm:$0xf]
        %v1247 = vld [vmem:[%s5 + $0x120] sm:$0xf]
        %v1248 = vld [vmem:[%s5 + $0x124] sm:$0xf]
        %v1249 = vld [vmem:[%s5 + $0x128] sm:$0xf]
        %v1250 = vld [vmem:[%s5 + $0x12c] sm:$0xf]
        %v1251 = vld [vmem:[%s5 + $0x130] sm:$0xf]
        %v1252 = vld [vmem:[%s5 + $0x134] sm:$0xf]
        %v1253 = vld [vmem:[%s5 + $0x138] sm:$0xf]
        %v1254 = vld [vmem:[%s5 + $0x13c] sm:$0xf]
        %v1255 = vld [vmem:[%s5 + $0x140] sm:$0xf]
        %v1256 = vld [vmem:[%s5 + $0x144] sm:$0xf]
        %v1257 = vld [vmem:[%s5 + $0x148] sm:$0xf]
        %v1258 = vld [vmem:[%s5 + $0x14c] sm:$0xf]
        %v1259 = vld [vmem:[%s5 + $0x150] sm:$0xf]
        %v1260 = vld [vmem:[%s5 + $0x154] sm:$0xf]
        %v1261 = vld [vmem:[%s5 + $0x158] sm:$0xf]
        %v1262 = vld [vmem:[%s5 + $0x15c] sm:$0xf]
        %v1263 = vld [vmem:[%s5 + $0x160] sm:$0xf]
        %v1264 = vld [vmem:[%s5 + $0x164] sm:$0xf]
        %v1265 = vld [vmem:[%s5 + $0x168] sm:$0xf]
        %v1266 = vld [vmem:[%s5 + $0x16c] sm:$0xf]
        %v1267 = vld [vmem:[%s5 + $0x170] sm:$0xf]
        %v1268 = vld [vmem:[%s5 + $0x174] sm:$0xf]
        %v1269 = vld [vmem:[%s5 + $0x178] sm:$0xf]
        %v1270 = vld [vmem:[%s5 + $0x17c] sm:$0xf]
        %v1271 = vld [vmem:[%s5 + $0x180] sm:$0xf]
        %v1272 = vld [vmem:[%s5 + $0x184] sm:$0xf]
        %v1273 = vld [vmem:[%s5 + $0x188] sm:$0xf]
        %v1274 = vld [vmem:[%s5 + $0x18c] sm:$0xf]
        %v1275 = vld [vmem:[%s5 + $0x190] sm:$0xf]
        %v1276 = vld [vmem:[%s5 + $0x194] sm:$0xf]
        %v1277 = vld [vmem:[%s5 + $0x198] sm:$0xf]
        %v1278 = vld [vmem:[%s5 + $0x19c] sm:$0xf]
        %v1279 = vld [vmem:[%s5 + $0x1a0] sm:$0xf]
        %v1280 = vld [vmem:[%s5 + $0x1a4] sm:$0xf]
        %v1281 = vld [vmem:[%s5 + $0x1a8] sm:$0xf]
        %v1282 = vld [vmem:[%s5 + $0x1ac] sm:$0xf]
        %v1283 = vld [vmem:[%s5 + $0x1b0] sm:$0xf]
        %v1284 = vld [vmem:[%s5 + $0x1b4] sm:$0xf]
        %v1285 = vld [vmem:[%s5 + $0x1b8] sm:$0xf]
        %v1286 = vld [vmem:[%s5 + $0x1bc] sm:$0xf]
        %v1287 = vld [vmem:[%s5 + $0x1c0] sm:$0xf]
        %v1288 = vld [vmem:[%s5 + $0x1c4] sm:$0xf]
        %v1289 = vld [vmem:[%s5 + $0x1c8] sm:$0xf]
        %v1290 = vld [vmem:[%s5 + $0x1cc] sm:$0xf]
        %v1291 = vld [vmem:[%s5 + $0x1d0] sm:$0xf]
        %v1292 = vld [vmem:[%s5 + $0x1d4] sm:$0xf]
        %v1293 = vld [vmem:[%s5 + $0x1d8] sm:$0xf]
        %v1294 = vld [vmem:[%s5 + $0x1dc] sm:$0xf]
        %v1295 = vld [vmem:[%s5 + $0x1e0] sm:$0xf]
        %v1296 = vld [vmem:[%s5 + $0x1e4] sm:$0xf]
        %v1297 = vld [vmem:[%s5 + $0x1e8] sm:$0xf]
        %v1298 = vld [vmem:[%s5 + $0x1ec] sm:$0xf]
        %v1299 = vld [vmem:[%s5 + $0x1f0] sm:$0xf]
        %v1300 = vld [vmem:[%s5 + $0x1f4] sm:$0xf]
        %v1301 = vld [vmem:[%s5 + $0x1f8] sm:$0xf]
        %v1302 = vld [vmem:[%s5 + $0x1fc] sm:$0xf]
        %v1303 = vld [vmem:[%s5 + $0x200] sm:$0xf]
        %v1304 = vld [vmem:[%s5 + $0x204] sm:$0xf]
        %v1305 = vld [vmem:[%s5 + $0x208] sm:$0xf]
        %v1306 = vld [vmem:[%s5 + $0x20c] sm:$0xf]
        %v1307 = vld [vmem:[%s5 + $0x210] sm:$0xf]
        %v1308 = vld [vmem:[%s5 + $0x214] sm:$0xf]
        %v1309 = vld [vmem:[%s5 + $0x218] sm:$0xf]
        %v1310 = vld [vmem:[%s5 + $0x21c] sm:$0xf]
        %v1311 = vld [vmem:[%s5 + $0x220] sm:$0xf]
        %v1312 = vld [vmem:[%s5 + $0x224] sm:$0xf]
        %v1313 = vld [vmem:[%s5 + $0x228] sm:$0xf]
        %v1314 = vld [vmem:[%s5 + $0x22c] sm:$0xf]
        %v1315 = vld [vmem:[%s5 + $0x230] sm:$0xf]
        %v1316 = vld [vmem:[%s5 + $0x234] sm:$0xf]
        %v1317 = vld [vmem:[%s5 + $0x238] sm:$0xf]
        %v1318 = vld [vmem:[%s5 + $0x23c] sm:$0xf]
        %v1319 = vld [vmem:[%s5 + $0x240] sm:$0xf]
        %v1320 = vld [vmem:[%s5 + $0x244] sm:$0xf]
        %v1321 = vld [vmem:[%s5 + $0x248] sm:$0xf]
        %v1322 = vld [vmem:[%s5 + $0x24c] sm:$0xf]
        %v1323 = vld [vmem:[%s5 + $0x250] sm:$0xf]
        %v1324 = vld [vmem:[%s5 + $0x254] sm:$0xf]
        %v1325 = vld [vmem:[%s5 + $0x258] sm:$0xf]
        %v1326 = vld [vmem:[%s5 + $0x25c] sm:$0xf]
        %v1327 = vld [vmem:[%s5 + $0x260] sm:$0xf]
        %v1328 = vld [vmem:[%s5 + $0x264] sm:$0xf]
        %v1329 = vld [vmem:[%s5 + $0x268] sm:$0xf]
        %v1330 = vld [vmem:[%s5 + $0x26c] sm:$0xf]
        %v1331 = vld [vmem:[%s5 + $0x270] sm:$0xf]
        %v1332 = vld [vmem:[%s5 + $0x274] sm:$0xf]
        %v1333 = vld [vmem:[%s5 + $0x278] sm:$0xf]
        %v1334 = vld [vmem:[%s5 + $0x27c] sm:$0xf]
        %v1335 = vld [vmem:[%s5 + $0x280] sm:$0xf]
        %v1336 = vld [vmem:[%s5 + $0x284] sm:$0xf]
        %v1337 = vld [vmem:[%s5 + $0x288] sm:$0xf]
        %v1338 = vld [vmem:[%s5 + $0x28c] sm:$0xf]
        %v1339 = vld [vmem:[%s5 + $0x290] sm:$0xf]
        %v1340 = vld [vmem:[%s5 + $0x294] sm:$0xf]
        %v1341 = vld [vmem:[%s5 + $0x298] sm:$0xf]
        %v1342 = vld [vmem:[%s5 + $0x29c] sm:$0xf]
        %v1343 = vld [vmem:[%s5 + $0x2a0] sm:$0xf]
        %v1344 = vld [vmem:[%s5 + $0x2a4] sm:$0xf]
        %v1345 = vld [vmem:[%s5 + $0x2a8] sm:$0xf]
        %v1346 = vld [vmem:[%s5 + $0x2ac] sm:$0xf]
        %v1347 = vld [vmem:[%s5 + $0x2b0] sm:$0xf]
        %v1348 = vld [vmem:[%s5 + $0x2b4] sm:$0xf]
        %v1349 = vld [vmem:[%s5 + $0x2b8] sm:$0xf]
        %v1350 = vld [vmem:[%s5 + $0x2bc] sm:$0xf]
        %v1351 = vld [vmem:[%s5 + $0x2c0] sm:$0xf]
        %v1352 = vld [vmem:[%s5 + $0x2c4] sm:$0xf]
        %v1353 = vld [vmem:[%s5 + $0x2c8] sm:$0xf]
        %v1354 = vld [vmem:[%s5 + $0x2cc] sm:$0xf]
        %v1355 = vld [vmem:[%s5 + $0x2d0] sm:$0xf]
        %v1356 = vld [vmem:[%s5 + $0x2d4] sm:$0xf]
        %v1357 = vld [vmem:[%s5 + $0x2d8] sm:$0xf]
        %v1358 = vld [vmem:[%s5 + $0x2dc] sm:$0xf]
        %v1359 = vld [vmem:[%s5 + $0x2e0] sm:$0xf]
        %v1360 = vld [vmem:[%s5 + $0x2e4] sm:$0xf]
        %v1361 = vld [vmem:[%s5 + $0x2e8] sm:$0xf]
        %v1362 = vld [vmem:[%s5 + $0x2ec] sm:$0xf]
        %v1363 = vld [vmem:[%s5 + $0x2f0] sm:$0xf]
        %v1364 = vld [vmem:[%s5 + $0x2f4] sm:$0xf]
        %v1365 = vld [vmem:[%s5 + $0x2f8] sm:$0xf]
        %v1366 = vld [vmem:[%s5 + $0x2fc] sm:$0xf]
        %v1367 = vld [vmem:[%s5 + $0x300] sm:$0xf]
        %v1368 = vld [vmem:[%s5 + $0x304] sm:$0xf]
        %v1369 = vld [vmem:[%s5 + $0x308] sm:$0xf]
        %v1370 = vld [vmem:[%s5 + $0x30c] sm:$0xf]
        %v1371 = vld [vmem:[%s5 + $0x310] sm:$0xf]
        %v1372 = vld [vmem:[%s5 + $0x314] sm:$0xf]
        %v1373 = vld [vmem:[%s5 + $0x318] sm:$0xf]
        %v1374 = vld [vmem:[%s5 + $0x31c] sm:$0xf]
        %v1375 = vld [vmem:[%s5 + $0x320] sm:$0xf]
        %v1376 = vld [vmem:[%s5 + $0x324] sm:$0xf]
        %v1377 = vld [vmem:[%s5 + $0x328] sm:$0xf]
        %v1378 = vld [vmem:[%s5 + $0x32c] sm:$0xf]
        %v1379 = vld [vmem:[%s5 + $0x330] sm:$0xf]
        %v1380 = vld [vmem:[%s5 + $0x334] sm:$0xf]
        %v1381 = vld [vmem:[%s5 + $0x338] sm:$0xf]
        %v1382 = vld [vmem:[%s5 + $0x33c] sm:$0xf]
        %v1383 = vld [vmem:[%s5 + $0x340] sm:$0xf]
        %v1384 = vld [vmem:[%s5 + $0x344] sm:$0xf]
        %v1385 = vld [vmem:[%s5 + $0x348] sm:$0xf]
        %v1386 = vld [vmem:[%s5 + $0x34c] sm:$0xf]
        %v1387 = vld [vmem:[%s5 + $0x350] sm:$0xf]
        %v1388 = vld [vmem:[%s5 + $0x354] sm:$0xf]
        %v1389 = vld [vmem:[%s5 + $0x358] sm:$0xf]
        %v1390 = vld [vmem:[%s5 + $0x35c] sm:$0xf]
        %v1391 = vld [vmem:[%s5 + $0x360] sm:$0xf]
        %v1392 = vld [vmem:[%s5 + $0x364] sm:$0xf]
        %v1393 = vld [vmem:[%s5 + $0x368] sm:$0xf]
        %v1394 = vld [vmem:[%s5 + $0x36c] sm:$0xf]
        %v1395 = vld [vmem:[%s5 + $0x370] sm:$0xf]
        %v1396 = vld [vmem:[%s5 + $0x374] sm:$0xf]
        %v1397 = vld [vmem:[%s5 + $0x378] sm:$0xf]
        %v1398 = vld [vmem:[%s5 + $0x37c] sm:$0xf]
        %v1399 = vld [vmem:[%s5 + $0x380] sm:$0xf]
        %v1400 = vld [vmem:[%s5 + $0x384] sm:$0xf]
        %v1401 = vld [vmem:[%s5 + $0x388] sm:$0xf]
        %v1402 = vld [vmem:[%s5 + $0x38c] sm:$0xf]
        %v1403 = vld [vmem:[%s5 + $0x390] sm:$0xf]
        %v1404 = vld [vmem:[%s5 + $0x394] sm:$0xf]
        %v1405 = vld [vmem:[%s5 + $0x398] sm:$0xf]
        %v1406 = vld [vmem:[%s5 + $0x39c] sm:$0xf]
        %v1407 = vld [vmem:[%s5 + $0x3a0] sm:$0xf]
        %v1408 = vld [vmem:[%s5 + $0x3a4] sm:$0xf]
        %v1409 = vld [vmem:[%s5 + $0x3a8] sm:$0xf]
        %v1410 = vld [vmem:[%s5 + $0x3ac] sm:$0xf]
        %v1411 = vld [vmem:[%s5 + $0x3b0] sm:$0xf]
        %v1412 = vld [vmem:[%s5 + $0x3b4] sm:$0xf]
        %v1413 = vld [vmem:[%s5 + $0x3b8] sm:$0xf]
        %v1414 = vld [vmem:[%s5 + $0x3bc] sm:$0xf]
        %v1415 = vld [vmem:[%s5 + $0x3c0] sm:$0xf]
        %v1416 = vld [vmem:[%s5 + $0x3c4] sm:$0xf]
        %v1417 = vld [vmem:[%s5 + $0x3c8] sm:$0xf]
        %v1418 = vld [vmem:[%s5 + $0x3cc] sm:$0xf]
        %v1419 = vld [vmem:[%s5 + $0x3d0] sm:$0xf]
        %v1420 = vld [vmem:[%s5 + $0x3d4] sm:$0xf]
        %v1421 = vld [vmem:[%s5 + $0x3d8] sm:$0xf]
        %v1422 = vld [vmem:[%s5 + $0x3dc] sm:$0xf]
        %v1423 = vld [vmem:[%s5 + $0x3e0] sm:$0xf]
        %v1424 = vld [vmem:[%s5 + $0x3e4] sm:$0xf]
        %v1425 = vld [vmem:[%s5 + $0x3e8] sm:$0xf]
        %v1426 = vld [vmem:[%s5 + $0x3ec] sm:$0xf]
        %v1427 = vld [vmem:[%s5 + $0x3f0] sm:$0xf]
        %v1428 = vld [vmem:[%s5 + $0x3f4] sm:$0xf]
        %v1429 = vld [vmem:[%s5 + $0x3f8] sm:$0xf]
        %v1430 = vld [vmem:[%s5 + $0x3fc] sm:$0xf]
        %v1431 = vld [vmem:[%s6] sm:$0x1]
        %v1688 = vunpack.c.l.b16 %v1175
        %v1689 = vunpack.c.l.b16 %v1176
        %v1690 = vunpack.c.l.b16 %v1177
        %v1691 = vunpack.c.l.b16 %v1178
        %v1692 = vunpack.c.l.b16 %v1179
        %v1693 = vunpack.c.l.b16 %v1180
        %v1694 = vunpack.c.l.b16 %v1181
        %v1695 = vunpack.c.l.b16 %v1182
        %v1696 = vunpack.c.l.b16 %v1183
        %v1697 = vunpack.c.l.b16 %v1184
        %v1698 = vunpack.c.l.b16 %v1185
        %v1699 = vunpack.c.l.b16 %v1186
        %v1700 = vunpack.c.l.b16 %v1187
        %v1701 = vunpack.c.l.b16 %v1188
        %v1702 = vunpack.c.l.b16 %v1189
        %v1703 = vunpack.c.l.b16 %v1190
        %v1704 = vunpack.c.l.b16 %v1191
        %v1705 = vunpack.c.l.b16 %v1192
        %v1706 = vunpack.c.l.b16 %v1193
        %v1707 = vunpack.c.l.b16 %v1194
        %v1708 = vunpack.c.l.b16 %v1195
        %v1709 = vunpack.c.l.b16 %v1196
        %v1710 = vunpack.c.l.b16 %v1197
        %v1711 = vunpack.c.l.b16 %v1198
        %v1712 = vunpack.c.l.b16 %v1199
        %v1713 = vunpack.c.l.b16 %v1200
        %v1714 = vunpack.c.l.b16 %v1201
        %v1715 = vunpack.c.l.b16 %v1202
        %v1716 = vunpack.c.l.b16 %v1203
        %v1717 = vunpack.c.l.b16 %v1204
        %v1718 = vunpack.c.l.b16 %v1205
        %v1719 = vunpack.c.l.b16 %v1206
        %v1720 = vunpack.c.l.b16 %v1207
        %v1721 = vunpack.c.l.b16 %v1208
        %v1722 = vunpack.c.l.b16 %v1209
        %v1723 = vunpack.c.l.b16 %v1210
        %v1724 = vunpack.c.l.b16 %v1211
        %v1725 = vunpack.c.l.b16 %v1212
        %v1726 = vunpack.c.l.b16 %v1213
        %v1727 = vunpack.c.l.b16 %v1214
        %v1728 = vunpack.c.l.b16 %v1215
        %v1729 = vunpack.c.l.b16 %v1216
        %v1730 = vunpack.c.l.b16 %v1217
        %v1731 = vunpack.c.l.b16 %v1218
        %v1732 = vunpack.c.l.b16 %v1219
        %v1733 = vunpack.c.l.b16 %v1220
        %v1734 = vunpack.c.l.b16 %v1221
        %v1735 = vunpack.c.l.b16 %v1222
        %v1736 = vunpack.c.l.b16 %v1223
        %v1737 = vunpack.c.l.b16 %v1224
        %v1738 = vunpack.c.l.b16 %v1225
        %v1739 = vunpack.c.l.b16 %v1226
        %v1740 = vunpack.c.l.b16 %v1227
        %v1741 = vunpack.c.l.b16 %v1228
        %v1742 = vunpack.c.l.b16 %v1229
        %v1743 = vunpack.c.l.b16 %v1230
        %v1744 = vunpack.c.l.b16 %v1231
        %v1745 = vunpack.c.l.b16 %v1232
        %v1746 = vunpack.c.l.b16 %v1233
        %v1747 = vunpack.c.l.b16 %v1234
        %v1748 = vunpack.c.l.b16 %v1235
        %v1749 = vunpack.c.l.b16 %v1236
        %v1750 = vunpack.c.l.b16 %v1237
        %v1751 = vunpack.c.l.b16 %v1238
        %v1752 = vunpack.c.l.b16 %v1239
        %v1753 = vunpack.c.l.b16 %v1240
        %v1754 = vunpack.c.l.b16 %v1241
        %v1755 = vunpack.c.l.b16 %v1242
        %v1756 = vunpack.c.l.b16 %v1243
        %v1757 = vunpack.c.l.b16 %v1244
        %v1758 = vunpack.c.l.b16 %v1245
        %v1759 = vunpack.c.l.b16 %v1246
        %v1760 = vunpack.c.l.b16 %v1247
        %v1761 = vunpack.c.l.b16 %v1248
        %v1762 = vunpack.c.l.b16 %v1249
        %v1763 = vunpack.c.l.b16 %v1250
        %v1764 = vunpack.c.l.b16 %v1251
        %v1765 = vunpack.c.l.b16 %v1252
        %v1766 = vunpack.c.l.b16 %v1253
        %v1767 = vunpack.c.l.b16 %v1254
        %v1768 = vunpack.c.l.b16 %v1255
        %v1769 = vunpack.c.l.b16 %v1256
        %v1770 = vunpack.c.l.b16 %v1257
        %v1771 = vunpack.c.l.b16 %v1258
        %v1772 = vunpack.c.l.b16 %v1259
        %v1773 = vunpack.c.l.b16 %v1260
        %v1774 = vunpack.c.l.b16 %v1261
        %v1775 = vunpack.c.l.b16 %v1262
        %v1776 = vunpack.c.l.b16 %v1263
        %v1777 = vunpack.c.l.b16 %v1264
        %v1778 = vunpack.c.l.b16 %v1265
        %v1779 = vunpack.c.l.b16 %v1266
        %v1780 = vunpack.c.l.b16 %v1267
        %v1781 = vunpack.c.l.b16 %v1268
        %v1782 = vunpack.c.l.b16 %v1269
        %v1783 = vunpack.c.l.b16 %v1270
        %v1784 = vunpack.c.l.b16 %v1271
        %v1785 = vunpack.c.l.b16 %v1272
        %v1786 = vunpack.c.l.b16 %v1273
        %v1787 = vunpack.c.l.b16 %v1274
        %v1788 = vunpack.c.l.b16 %v1275
        %v1789 = vunpack.c.l.b16 %v1276
        %v1790 = vunpack.c.l.b16 %v1277
        %v1791 = vunpack.c.l.b16 %v1278
        %v1792 = vunpack.c.l.b16 %v1279
        %v1793 = vunpack.c.l.b16 %v1280
        %v1794 = vunpack.c.l.b16 %v1281
        %v1795 = vunpack.c.l.b16 %v1282
        %v1796 = vunpack.c.l.b16 %v1283
        %v1797 = vunpack.c.l.b16 %v1284
        %v1798 = vunpack.c.l.b16 %v1285
        %v1799 = vunpack.c.l.b16 %v1286
        %v1800 = vunpack.c.l.b16 %v1287
        %v1801 = vunpack.c.l.b16 %v1288
        %v1802 = vunpack.c.l.b16 %v1289
        %v1803 = vunpack.c.l.b16 %v1290
        %v1804 = vunpack.c.l.b16 %v1291
        %v1805 = vunpack.c.l.b16 %v1292
        %v1806 = vunpack.c.l.b16 %v1293
        %v1807 = vunpack.c.l.b16 %v1294
        %v1808 = vunpack.c.l.b16 %v1295
        %v1809 = vunpack.c.l.b16 %v1296
        %v1810 = vunpack.c.l.b16 %v1297
        %v1811 = vunpack.c.l.b16 %v1298
        %v1812 = vunpack.c.l.b16 %v1299
        %v1813 = vunpack.c.l.b16 %v1300
        %v1814 = vunpack.c.l.b16 %v1301
        %v1815 = vunpack.c.l.b16 %v1302
        %v1816 = vunpack.c.l.b16 %v1303
        %v1817 = vunpack.c.l.b16 %v1304
        %v1818 = vunpack.c.l.b16 %v1305
        %v1819 = vunpack.c.l.b16 %v1306
        %v1820 = vunpack.c.l.b16 %v1307
        %v1821 = vunpack.c.l.b16 %v1308
        %v1822 = vunpack.c.l.b16 %v1309
        %v1823 = vunpack.c.l.b16 %v1310
        %v1824 = vunpack.c.l.b16 %v1311
        %v1825 = vunpack.c.l.b16 %v1312
        %v1826 = vunpack.c.l.b16 %v1313
        %v1827 = vunpack.c.l.b16 %v1314
        %v1828 = vunpack.c.l.b16 %v1315
        %v1829 = vunpack.c.l.b16 %v1316
        %v1830 = vunpack.c.l.b16 %v1317
        %v1831 = vunpack.c.l.b16 %v1318
        %v1832 = vunpack.c.l.b16 %v1319
        %v1833 = vunpack.c.l.b16 %v1320
        %v1834 = vunpack.c.l.b16 %v1321
        %v1835 = vunpack.c.l.b16 %v1322
        %v1836 = vunpack.c.l.b16 %v1323
        %v1837 = vunpack.c.l.b16 %v1324
        %v1838 = vunpack.c.l.b16 %v1325
        %v1839 = vunpack.c.l.b16 %v1326
        %v1840 = vunpack.c.l.b16 %v1327
        %v1841 = vunpack.c.l.b16 %v1328
        %v1842 = vunpack.c.l.b16 %v1329
        %v1843 = vunpack.c.l.b16 %v1330
        %v1844 = vunpack.c.l.b16 %v1331
        %v1845 = vunpack.c.l.b16 %v1332
        %v1846 = vunpack.c.l.b16 %v1333
        %v1847 = vunpack.c.l.b16 %v1334
        %v1848 = vunpack.c.l.b16 %v1335
        %v1849 = vunpack.c.l.b16 %v1336
        %v1850 = vunpack.c.l.b16 %v1337
        %v1851 = vunpack.c.l.b16 %v1338
        %v1852 = vunpack.c.l.b16 %v1339
        %v1853 = vunpack.c.l.b16 %v1340
        %v1854 = vunpack.c.l.b16 %v1341
        %v1855 = vunpack.c.l.b16 %v1342
        %v1856 = vunpack.c.l.b16 %v1343
        %v1857 = vunpack.c.l.b16 %v1344
        %v1858 = vunpack.c.l.b16 %v1345
        %v1859 = vunpack.c.l.b16 %v1346
        %v1860 = vunpack.c.l.b16 %v1347
        %v1861 = vunpack.c.l.b16 %v1348
        %v1862 = vunpack.c.l.b16 %v1349
        %v1863 = vunpack.c.l.b16 %v1350
        %v1864 = vunpack.c.l.b16 %v1351
        %v1865 = vunpack.c.l.b16 %v1352
        %v1866 = vunpack.c.l.b16 %v1353
        %v1867 = vunpack.c.l.b16 %v1354
        %v1868 = vunpack.c.l.b16 %v1355
        %v1869 = vunpack.c.l.b16 %v1356
        %v1870 = vunpack.c.l.b16 %v1357
        %v1871 = vunpack.c.l.b16 %v1358
        %v1872 = vunpack.c.l.b16 %v1359
        %v1873 = vunpack.c.l.b16 %v1360
        %v1874 = vunpack.c.l.b16 %v1361
        %v1875 = vunpack.c.l.b16 %v1362
        %v1876 = vunpack.c.l.b16 %v1363
        %v1877 = vunpack.c.l.b16 %v1364
        %v1878 = vunpack.c.l.b16 %v1365
        %v1879 = vunpack.c.l.b16 %v1366
        %v1880 = vunpack.c.l.b16 %v1367
        %v1881 = vunpack.c.l.b16 %v1368
        %v1882 = vunpack.c.l.b16 %v1369
        %v1883 = vunpack.c.l.b16 %v1370
        %v1884 = vunpack.c.l.b16 %v1371
        %v1885 = vunpack.c.l.b16 %v1372
        %v1886 = vunpack.c.l.b16 %v1373
        %v1887 = vunpack.c.l.b16 %v1374
        %v1888 = vunpack.c.l.b16 %v1375
        %v1889 = vunpack.c.l.b16 %v1376
        %v1890 = vunpack.c.l.b16 %v1377
        %v1891 = vunpack.c.l.b16 %v1378
        %v1892 = vunpack.c.l.b16 %v1379
        %v1893 = vunpack.c.l.b16 %v1380
        %v1894 = vunpack.c.l.b16 %v1381
        %v1895 = vunpack.c.l.b16 %v1382
        %v1896 = vunpack.c.l.b16 %v1383
        %v1897 = vunpack.c.l.b16 %v1384
        %v1898 = vunpack.c.l.b16 %v1385
        %v1899 = vunpack.c.l.b16 %v1386
        %v1900 = vunpack.c.l.b16 %v1387
        %v1901 = vunpack.c.l.b16 %v1388
        %v1902 = vunpack.c.l.b16 %v1389
        %v1903 = vunpack.c.l.b16 %v1390
        %v1904 = vunpack.c.l.b16 %v1391
        %v1905 = vunpack.c.l.b16 %v1392
        %v1906 = vunpack.c.l.b16 %v1393
        %v1907 = vunpack.c.l.b16 %v1394
        %v1908 = vunpack.c.l.b16 %v1395
        %v1909 = vunpack.c.l.b16 %v1396
        %v1910 = vunpack.c.l.b16 %v1397
        %v1911 = vunpack.c.l.b16 %v1398
        %v1912 = vunpack.c.l.b16 %v1399
        %v1913 = vunpack.c.l.b16 %v1400
        %v1914 = vunpack.c.l.b16 %v1401
        %v1915 = vunpack.c.l.b16 %v1402
        %v1916 = vunpack.c.l.b16 %v1403
        %v1917 = vunpack.c.l.b16 %v1404
        %v1918 = vunpack.c.l.b16 %v1405
        %v1919 = vunpack.c.l.b16 %v1406
        %v1920 = vunpack.c.l.b16 %v1407
        %v1921 = vunpack.c.l.b16 %v1408
        %v1922 = vunpack.c.l.b16 %v1409
        %v1923 = vunpack.c.l.b16 %v1410
        %v1924 = vunpack.c.l.b16 %v1411
        %v1925 = vunpack.c.l.b16 %v1412
        %v1926 = vunpack.c.l.b16 %v1413
        %v1927 = vunpack.c.l.b16 %v1414
        %v1928 = vunpack.c.l.b16 %v1415
        %v1929 = vunpack.c.l.b16 %v1416
        %v1930 = vunpack.c.l.b16 %v1417
        %v1931 = vunpack.c.l.b16 %v1418
        %v1932 = vunpack.c.l.b16 %v1419
        %v1933 = vunpack.c.l.b16 %v1420
        %v1934 = vunpack.c.l.b16 %v1421
        %v1935 = vunpack.c.l.b16 %v1422
        %v1936 = vunpack.c.l.b16 %v1423
        %v1937 = vunpack.c.l.b16 %v1424
        %v1938 = vunpack.c.l.b16 %v1425
        %v1939 = vunpack.c.l.b16 %v1426
        %v1940 = vunpack.c.l.b16 %v1427
        %v1941 = vunpack.c.l.b16 %v1428
        %v1942 = vunpack.c.l.b16 %v1429
        %v1943 = vunpack.c.l.b16 %v1430
        %v1944 = vpack.c.b16 %v1689, %v1688
        %v1945 = vpack.c.b16 %v1691, %v1690
        %v1946 = vpack.c.b16 %v1693, %v1692
        %v1947 = vpack.c.b16 %v1695, %v1694
        %v1948 = vpack.c.b16 %v1697, %v1696
        %v1949 = vpack.c.b16 %v1699, %v1698
        %v1950 = vpack.c.b16 %v1701, %v1700
        %v1951 = vpack.c.b16 %v1703, %v1702
        %v1952 = vpack.c.b16 %v1705, %v1704
        %v1953 = vpack.c.b16 %v1707, %v1706
        %v1954 = vpack.c.b16 %v1709, %v1708
        %v1955 = vpack.c.b16 %v1711, %v1710
        %v1956 = vpack.c.b16 %v1713, %v1712
        %v1957 = vpack.c.b16 %v1715, %v1714
        %v1958 = vpack.c.b16 %v1717, %v1716
        %v1959 = vpack.c.b16 %v1719, %v1718
        %v1960 = vpack.c.b16 %v1721, %v1720
        %v1961 = vpack.c.b16 %v1723, %v1722
        %v1962 = vpack.c.b16 %v1725, %v1724
        %v1963 = vpack.c.b16 %v1727, %v1726
        %v1964 = vpack.c.b16 %v1729, %v1728
        %v1965 = vpack.c.b16 %v1731, %v1730
        %v1966 = vpack.c.b16 %v1733, %v1732
        %v1967 = vpack.c.b16 %v1735, %v1734
        %v1968 = vpack.c.b16 %v1737, %v1736
        %v1969 = vpack.c.b16 %v1739, %v1738
        %v1970 = vpack.c.b16 %v1741, %v1740
        %v1971 = vpack.c.b16 %v1743, %v1742
        %v1972 = vpack.c.b16 %v1745, %v1744
        %v1973 = vpack.c.b16 %v1747, %v1746
        %v1974 = vpack.c.b16 %v1749, %v1748
        %v1975 = vpack.c.b16 %v1751, %v1750
        %v1976 = vpack.c.b16 %v1753, %v1752
        %v1977 = vpack.c.b16 %v1755, %v1754
        %v1978 = vpack.c.b16 %v1757, %v1756
        %v1979 = vpack.c.b16 %v1759, %v1758
        %v1980 = vpack.c.b16 %v1761, %v1760
        %v1981 = vpack.c.b16 %v1763, %v1762
        %v1982 = vpack.c.b16 %v1765, %v1764
        %v1983 = vpack.c.b16 %v1767, %v1766
        %v1984 = vpack.c.b16 %v1769, %v1768
        %v1985 = vpack.c.b16 %v1771, %v1770
        %v1986 = vpack.c.b16 %v1773, %v1772
        %v1987 = vpack.c.b16 %v1775, %v1774
        %v1988 = vpack.c.b16 %v1777, %v1776
        %v1989 = vpack.c.b16 %v1779, %v1778
        %v1990 = vpack.c.b16 %v1781, %v1780
        %v1991 = vpack.c.b16 %v1783, %v1782
        %v1992 = vpack.c.b16 %v1785, %v1784
        %v1993 = vpack.c.b16 %v1787, %v1786
        %v1994 = vpack.c.b16 %v1789, %v1788
        %v1995 = vpack.c.b16 %v1791, %v1790
        %v1996 = vpack.c.b16 %v1793, %v1792
        %v1997 = vpack.c.b16 %v1795, %v1794
        %v1998 = vpack.c.b16 %v1797, %v1796
        %v1999 = vpack.c.b16 %v1799, %v1798
        %v2000 = vpack.c.b16 %v1801, %v1800
        %v2001 = vpack.c.b16 %v1803, %v1802
        %v2002 = vpack.c.b16 %v1805, %v1804
        %v2003 = vpack.c.b16 %v1807, %v1806
        %v2004 = vpack.c.b16 %v1809, %v1808
        %v2005 = vpack.c.b16 %v1811, %v1810
        %v2006 = vpack.c.b16 %v1813, %v1812
        %v2007 = vpack.c.b16 %v1815, %v1814
        %v2008 = vpack.c.b16 %v1817, %v1816
        %v2009 = vpack.c.b16 %v1819, %v1818
        %v2010 = vpack.c.b16 %v1821, %v1820
        %v2011 = vpack.c.b16 %v1823, %v1822
        %v2012 = vpack.c.b16 %v1825, %v1824
        %v2013 = vpack.c.b16 %v1827, %v1826
        %v2014 = vpack.c.b16 %v1829, %v1828
        %v2015 = vpack.c.b16 %v1831, %v1830
        %v2016 = vpack.c.b16 %v1833, %v1832
        %v2017 = vpack.c.b16 %v1835, %v1834
        %v2018 = vpack.c.b16 %v1837, %v1836
        %v2019 = vpack.c.b16 %v1839, %v1838
        %v2020 = vpack.c.b16 %v1841, %v1840
        %v2021 = vpack.c.b16 %v1843, %v1842
        %v2022 = vpack.c.b16 %v1845, %v1844
        %v2023 = vpack.c.b16 %v1847, %v1846
        %v2024 = vpack.c.b16 %v1849, %v1848
        %v2025 = vpack.c.b16 %v1851, %v1850
        %v2026 = vpack.c.b16 %v1853, %v1852
        %v2027 = vpack.c.b16 %v1855, %v1854
        %v2028 = vpack.c.b16 %v1857, %v1856
        %v2029 = vpack.c.b16 %v1859, %v1858
        %v2030 = vpack.c.b16 %v1861, %v1860
        %v2031 = vpack.c.b16 %v1863, %v1862
        %v2032 = vpack.c.b16 %v1865, %v1864
        %v2033 = vpack.c.b16 %v1867, %v1866
        %v2034 = vpack.c.b16 %v1869, %v1868
        %v2035 = vpack.c.b16 %v1871, %v1870
        %v2036 = vpack.c.b16 %v1873, %v1872
        %v2037 = vpack.c.b16 %v1875, %v1874
        %v2038 = vpack.c.b16 %v1877, %v1876
        %v2039 = vpack.c.b16 %v1879, %v1878
        %v2040 = vpack.c.b16 %v1881, %v1880
        %v2041 = vpack.c.b16 %v1883, %v1882
        %v2042 = vpack.c.b16 %v1885, %v1884
        %v2043 = vpack.c.b16 %v1887, %v1886
        %v2044 = vpack.c.b16 %v1889, %v1888
        %v2045 = vpack.c.b16 %v1891, %v1890
        %v2046 = vpack.c.b16 %v1893, %v1892
        %v2047 = vpack.c.b16 %v1895, %v1894
        %v2048 = vpack.c.b16 %v1897, %v1896
        %v2049 = vpack.c.b16 %v1899, %v1898
        %v2050 = vpack.c.b16 %v1901, %v1900
        %v2051 = vpack.c.b16 %v1903, %v1902
        %v2052 = vpack.c.b16 %v1905, %v1904
        %v2053 = vpack.c.b16 %v1907, %v1906
        %v2054 = vpack.c.b16 %v1909, %v1908
        %v2055 = vpack.c.b16 %v1911, %v1910
        %v2056 = vpack.c.b16 %v1913, %v1912
        %v2057 = vpack.c.b16 %v1915, %v1914
        %v2058 = vpack.c.b16 %v1917, %v1916
        %v2059 = vpack.c.b16 %v1919, %v1918
        %v2060 = vpack.c.b16 %v1921, %v1920
        %v2061 = vpack.c.b16 %v1923, %v1922
        %v2062 = vpack.c.b16 %v1925, %v1924
        %v2063 = vpack.c.b16 %v1927, %v1926
        %v2064 = vpack.c.b16 %v1929, %v1928
        %v2065 = vpack.c.b16 %v1931, %v1930
        %v2066 = vpack.c.b16 %v1933, %v1932
        %v2067 = vpack.c.b16 %v1935, %v1934
        %v2068 = vpack.c.b16 %v1937, %v1936
        %v2069 = vpack.c.b16 %v1939, %v1938
        %v2070 = vpack.c.b16 %v1941, %v1940
        %v2071 = vpack.c.b16 %v1943, %v1942
        %2200 = vmatpush.bf16.msra.mxu0 %v1951
        %2201 = vmatpush.bf16.msra.mxu0 %v1950
        %2202 = vmatpush.bf16.msra.mxu0 %v1949
        %2203 = vmatpush.bf16.msra.mxu0 %v1948
        %2204 = vmatpush.bf16.msra.mxu0 %v1947
        %2205 = vmatpush.bf16.msra.mxu0 %v1946
        %2206 = vmatpush.bf16.msra.mxu0 %v1945
        %2207 = vmatpush.bf16.msra.mxu0 %v1944
        %2208 = vmatmul.bf16.gmra.mxu0 %v1159
        %v2209 = vpop.f32.mrf.mxu0
        %v2210 = vadd.f32 %v1431, %v2209
        %v2211 = vpop.f32.mrf.mxu0
        %2212 = vdwg.mxu0
        %2213 = vmatpush.bf16.msra.mxu0 %v1959
        %2214 = vmatpush.bf16.msra.mxu0 %v1958
        %2215 = vmatpush.bf16.msra.mxu0 %v1957
        %2216 = vmatpush.bf16.msra.mxu0 %v1956
        %2217 = vmatpush.bf16.msra.mxu0 %v1955
        %2218 = vmatpush.bf16.msra.mxu0 %v1954
        %2219 = vmatpush.bf16.msra.mxu0 %v1953
        %2220 = vmatpush.bf16.msra.mxu0 %v1952
        %2221 = vmatmul.bf16.gmra.mxu0 %v1160
        %v2222 = vpop.f32.mrf.mxu0
        %v2223 = vadd.f32 %v2210, %v2222
        %v2224 = vpop.f32.mrf.mxu0
        %2225 = vdwg.mxu0
        %2226 = vmatpush.bf16.msra.mxu0 %v1967
        %2227 = vmatpush.bf16.msra.mxu0 %v1966
        %2228 = vmatpush.bf16.msra.mxu0 %v1965
        %2229 = vmatpush.bf16.msra.mxu0 %v1964
        %2230 = vmatpush.bf16.msra.mxu0 %v1963
        %2231 = vmatpush.bf16.msra.mxu0 %v1962
        %2232 = vmatpush.bf16.msra.mxu0 %v1961
        %2233 = vmatpush.bf16.msra.mxu0 %v1960
        %2234 = vmatmul.bf16.gmra.mxu0 %v1161
        %v2235 = vpop.f32.mrf.mxu0
        %v2236 = vadd.f32 %v2223, %v2235
        %v2237 = vpop.f32.mrf.mxu0
        %2238 = vdwg.mxu0
        %2239 = vmatpush.bf16.msra.mxu0 %v1975
        %2240 = vmatpush.bf16.msra.mxu0 %v1974
        %2241 = vmatpush.bf16.msra.mxu0 %v1973
        %2242 = vmatpush.bf16.msra.mxu0 %v1972
        %2243 = vmatpush.bf16.msra.mxu0 %v1971
        %2244 = vmatpush.bf16.msra.mxu0 %v1970
        %2245 = vmatpush.bf16.msra.mxu0 %v1969
        %2246 = vmatpush.bf16.msra.mxu0 %v1968
        %2247 = vmatmul.bf16.gmra.mxu0 %v1162
        %v2248 = vpop.f32.mrf.mxu0
        %v2249 = vadd.f32 %v2236, %v2248
        %v2250 = vpop.f32.mrf.mxu0
        %2251 = vdwg.mxu0
        %2252 = vmatpush.bf16.msra.mxu0 %v1983
        %2253 = vmatpush.bf16.msra.mxu0 %v1982
        %2254 = vmatpush.bf16.msra.mxu0 %v1981
        %2255 = vmatpush.bf16.msra.mxu0 %v1980
        %2256 = vmatpush.bf16.msra.mxu0 %v1979
        %2257 = vmatpush.bf16.msra.mxu0 %v1978
        %2258 = vmatpush.bf16.msra.mxu0 %v1977
        %2259 = vmatpush.bf16.msra.mxu0 %v1976
        %2260 = vmatmul.bf16.gmra.mxu0 %v1163
        %v2261 = vpop.f32.mrf.mxu0
        %v2262 = vadd.f32 %v2249, %v2261
        %v2263 = vpop.f32.mrf.mxu0
        %2264 = vdwg.mxu0
        %2265 = vmatpush.bf16.msra.mxu0 %v1991
        %2266 = vmatpush.bf16.msra.mxu0 %v1990
        %2267 = vmatpush.bf16.msra.mxu0 %v1989
        %2268 = vmatpush.bf16.msra.mxu0 %v1988
        %2269 = vmatpush.bf16.msra.mxu0 %v1987
        %2270 = vmatpush.bf16.msra.mxu0 %v1986
        %2271 = vmatpush.bf16.msra.mxu0 %v1985
        %2272 = vmatpush.bf16.msra.mxu0 %v1984
        %2273 = vmatmul.bf16.gmra.mxu0 %v1164
        %v2274 = vpop.f32.mrf.mxu0
        %v2275 = vadd.f32 %v2262, %v2274
        %v2276 = vpop.f32.mrf.mxu0
        %2277 = vdwg.mxu0
        %2278 = vmatpush.bf16.msra.mxu0 %v1999
        %2279 = vmatpush.bf16.msra.mxu0 %v1998
        %2280 = vmatpush.bf16.msra.mxu0 %v1997
        %2281 = vmatpush.bf16.msra.mxu0 %v1996
        %2282 = vmatpush.bf16.msra.mxu0 %v1995
        %2283 = vmatpush.bf16.msra.mxu0 %v1994
        %2284 = vmatpush.bf16.msra.mxu0 %v1993
        %2285 = vmatpush.bf16.msra.mxu0 %v1992
        %2286 = vmatmul.bf16.gmra.mxu0 %v1165
        %v2287 = vpop.f32.mrf.mxu0
        %v2288 = vadd.f32 %v2275, %v2287
        %v2289 = vpop.f32.mrf.mxu0
        %2290 = vdwg.mxu0
        %2291 = vmatpush.bf16.msra.mxu0 %v2007
        %2292 = vmatpush.bf16.msra.mxu0 %v2006
        %2293 = vmatpush.bf16.msra.mxu0 %v2005
        %2294 = vmatpush.bf16.msra.mxu0 %v2004
        %2295 = vmatpush.bf16.msra.mxu0 %v2003
        %2296 = vmatpush.bf16.msra.mxu0 %v2002
        %2297 = vmatpush.bf16.msra.mxu0 %v2001
        %2298 = vmatpush.bf16.msra.mxu0 %v2000
        %2299 = vmatmul.bf16.gmra.mxu0 %v1166
        %v2300 = vpop.f32.mrf.mxu0
        %v2301 = vadd.f32 %v2288, %v2300
        %v2302 = vpop.f32.mrf.mxu0
        %2303 = vdwg.mxu0
        %2304 = vmatpush.bf16.msra.mxu0 %v2015
        %2305 = vmatpush.bf16.msra.mxu0 %v2014
        %2306 = vmatpush.bf16.msra.mxu0 %v2013
        %2307 = vmatpush.bf16.msra.mxu0 %v2012
        %2308 = vmatpush.bf16.msra.mxu0 %v2011
        %2309 = vmatpush.bf16.msra.mxu0 %v2010
        %2310 = vmatpush.bf16.msra.mxu0 %v2009
        %2311 = vmatpush.bf16.msra.mxu0 %v2008
        %2312 = vmatmul.bf16.gmra.mxu0 %v1167
        %v2313 = vpop.f32.mrf.mxu0
        %v2314 = vadd.f32 %v2301, %v2313
        %v2315 = vpop.f32.mrf.mxu0
        %2316 = vdwg.mxu0
        %2317 = vmatpush.bf16.msra.mxu0 %v2023
        %2318 = vmatpush.bf16.msra.mxu0 %v2022
        %2319 = vmatpush.bf16.msra.mxu0 %v2021
        %2320 = vmatpush.bf16.msra.mxu0 %v2020
        %2321 = vmatpush.bf16.msra.mxu0 %v2019
        %2322 = vmatpush.bf16.msra.mxu0 %v2018
        %2323 = vmatpush.bf16.msra.mxu0 %v2017
        %2324 = vmatpush.bf16.msra.mxu0 %v2016
        %2325 = vmatmul.bf16.gmra.mxu0 %v1168
        %v2326 = vpop.f32.mrf.mxu0
        %v2327 = vadd.f32 %v2314, %v2326
        %v2328 = vpop.f32.mrf.mxu0
        %2329 = vdwg.mxu0
        %2330 = vmatpush.bf16.msra.mxu0 %v2031
        %2331 = vmatpush.bf16.msra.mxu0 %v2030
        %2332 = vmatpush.bf16.msra.mxu0 %v2029
        %2333 = vmatpush.bf16.msra.mxu0 %v2028
        %2334 = vmatpush.bf16.msra.mxu0 %v2027
        %2335 = vmatpush.bf16.msra.mxu0 %v2026
        %2336 = vmatpush.bf16.msra.mxu0 %v2025
        %2337 = vmatpush.bf16.msra.mxu0 %v2024
        %2338 = vmatmul.bf16.gmra.mxu0 %v1169
        %v2339 = vpop.f32.mrf.mxu0
        %v2340 = vadd.f32 %v2327, %v2339
        %v2341 = vpop.f32.mrf.mxu0
        %2342 = vdwg.mxu0
        %2343 = vmatpush.bf16.msra.mxu0 %v2039
        %2344 = vmatpush.bf16.msra.mxu0 %v2038
        %2345 = vmatpush.bf16.msra.mxu0 %v2037
        %2346 = vmatpush.bf16.msra.mxu0 %v2036
        %2347 = vmatpush.bf16.msra.mxu0 %v2035
        %2348 = vmatpush.bf16.msra.mxu0 %v2034
        %2349 = vmatpush.bf16.msra.mxu0 %v2033
        %2350 = vmatpush.bf16.msra.mxu0 %v2032
        %2351 = vmatmul.bf16.gmra.mxu0 %v1170
        %v2352 = vpop.f32.mrf.mxu0
        %v2353 = vadd.f32 %v2340, %v2352
        %v2354 = vpop.f32.mrf.mxu0
        %2355 = vdwg.mxu0
        %2356 = vmatpush.bf16.msra.mxu0 %v2047
        %2357 = vmatpush.bf16.msra.mxu0 %v2046
        %2358 = vmatpush.bf16.msra.mxu0 %v2045
        %2359 = vmatpush.bf16.msra.mxu0 %v2044
        %2360 = vmatpush.bf16.msra.mxu0 %v2043
        %2361 = vmatpush.bf16.msra.mxu0 %v2042
        %2362 = vmatpush.bf16.msra.mxu0 %v2041
        %2363 = vmatpush.bf16.msra.mxu0 %v2040
        %2364 = vmatmul.bf16.gmra.mxu0 %v1171
        %v2365 = vpop.f32.mrf.mxu0
        %v2366 = vadd.f32 %v2353, %v2365
        %v2367 = vpop.f32.mrf.mxu0
        %2368 = vdwg.mxu0
        %2369 = vmatpush.bf16.msra.mxu0 %v2055
        %2370 = vmatpush.bf16.msra.mxu0 %v2054
        %2371 = vmatpush.bf16.msra.mxu0 %v2053
        %2372 = vmatpush.bf16.msra.mxu0 %v2052
        %2373 = vmatpush.bf16.msra.mxu0 %v2051
        %2374 = vmatpush.bf16.msra.mxu0 %v2050
        %2375 = vmatpush.bf16.msra.mxu0 %v2049
        %2376 = vmatpush.bf16.msra.mxu0 %v2048
        %2377 = vmatmul.bf16.gmra.mxu0 %v1172
        %v2378 = vpop.f32.mrf.mxu0
        %v2379 = vadd.f32 %v2366, %v2378
        %v2380 = vpop.f32.mrf.mxu0
        %2381 = vdwg.mxu0
        %2382 = vmatpush.bf16.msra.mxu0 %v2063
        %2383 = vmatpush.bf16.msra.mxu0 %v2062
        %2384 = vmatpush.bf16.msra.mxu0 %v2061
        %2385 = vmatpush.bf16.msra.mxu0 %v2060
        %2386 = vmatpush.bf16.msra.mxu0 %v2059
        %2387 = vmatpush.bf16.msra.mxu0 %v2058
        %2388 = vmatpush.bf16.msra.mxu0 %v2057
        %2389 = vmatpush.bf16.msra.mxu0 %v2056
        %2390 = vmatmul.bf16.gmra.mxu0 %v1173
        %v2391 = vpop.f32.mrf.mxu0
        %v2392 = vadd.f32 %v2379, %v2391
        %v2393 = vpop.f32.mrf.mxu0
        %2394 = vdwg.mxu0
        %2395 = vmatpush.bf16.msra.mxu0 %v2071
        %2396 = vmatpush.bf16.msra.mxu0 %v2070
        %2397 = vmatpush.bf16.msra.mxu0 %v2069
        %2398 = vmatpush.bf16.msra.mxu0 %v2068
        %2399 = vmatpush.bf16.msra.mxu0 %v2067
        %2400 = vmatpush.bf16.msra.mxu0 %v2066
        %2401 = vmatpush.bf16.msra.mxu0 %v2065
        %2402 = vmatpush.bf16.msra.mxu0 %v2064
        %2403 = vmatmul.bf16.gmra.mxu0 %v1174
        %v2404 = vpop.f32.mrf.mxu0
        %v2405 = vadd.f32 %v2392, %v2404
        %v2406 = vpop.f32.mrf.mxu0
        %2407 = vdwg.mxu0
        %vm2408 = vcmask 819200
        %2409 = vst.msk [vmem:[%s270] sm:$0x1] %vm2408, %v2405
        %s2410 = sand.u32 %s181, 1
        %s2411 = scalar_lea.sflag [#allocation3], %s2410
        %s2412 = sand.u32 %s181, 1
        %s2413 = scalar_lea.vmem [#allocation2], %s2412
        // Predicated region
        $region49: #{classi2_forward.1} parent=47 // pred_check
          %p2414 = pneg %p191
        $region50: #{classi2_forward.1} parent=47 // pred_check_branch
          %2416 = sbr.rel (%p2414) target = $region52
        $region51: #{classi2_forward.1} parent=47 // pred_region
          %2418 = vsyncadd %s2411, 0
          %s2419 = scalar_lea.hbm %s7, %s21
          %s2421 = sshll.u32 %s2413, 4
          %s2422 = int_to_ptr.vmem [resolvable:$true] %s2421
          %s2423 = sshll.u32 %s2419, 4
          %s2424 = int_to_ptr.hbm [resolvable:$true] %s2423
          %2426 = dma.vmem_to_hbm [thread:$0]  %s2422, 16, %s2424, %s2411
        $region52: #{classi2_forward.1} parent=47 // pred_fallthru
          _
      $region48: #{classi2_forward.1} parent=5 // pred_fallthru
        _
      %p2427 = scmp.le.s32.totalorder 2, %s16
      // Predicated region
      $region53: #{classi2_forward.1} parent=5 // pred_check
        %p2428 = pneg %p2427
      $region54: #{classi2_forward.1} parent=5 // pred_check_branch
        %2430 = sbr.rel (%p2428) target = $region56
      $region55: #{classi2_forward.1} parent=5 // pred_region
        %s2431 = ssub.s32 %s16, 2
        // Predicated region
        $region57: #{classi2_forward.1} parent=55 // pred_check
          %p2432 = pneg %p197
        $region58: #{classi2_forward.1} parent=55 // pred_check_branch
          %2434 = sbr.rel (%p2432) target = $region60
        $region59: #{classi2_forward.1} parent=55 // pred_region
          %s2435 = sand.u32 %s182, 1
          %s2436 = scalar_lea.sflag [#allocation3], %s2435
          %s2437 = sand.u32 %s182, 1
          %s2438 = scalar_lea.vmem [#allocation2], %s2437
          %2440 = dma.done %s2436, 16
        $region60: #{classi2_forward.1} parent=55 // pred_fallthru
          _
      $region56: #{classi2_forward.1} parent=5 // pred_fallthru
        _
    $region6: #{classi2_forward.1} parent=1 // loop_footer
      %s20 = sadd.s32 1, %s16
    $region7: #{classi2_forward.1} parent=1 // loop_footer_branch
      %15 = sbr.rel target = $region3
    $region8: #{classi2_forward.1} parent=1 // loop_exit
      _
    %2441 = vsyncpa [#allocation3], 1
    %s2442 = scalar_lea.sflag [#allocation3], 1
    %2443 = vsyncpa %s2442, 1

</llo_original>
